<compile_context>
chip_gen: v5e
topology: v5e:2x2
jax: 0.10.0
libtpu: 0.0.40
codegen_flags: <defaults>
</compile_context>

<pallas_src>
import functools
import math

import jax
import jax.numpy as jnp
from jax.experimental import pallas as pl
from jax.experimental.pallas import tpu as pltpu

NEG_INF = -1.0e9  # matches torch masked_fill_(mask, -1000000000.0)


def _erf_f32(x):
    # float32 rational erf approximation (matches lax.erf to ~ulp), implemented
    # with plain VPU ops so it lowers cleanly in Mosaic.
    x = jnp.clip(x, -4.0, 4.0)
    x2 = x * x
    a = jnp.float32(-2.72614225801306e-10)
    a = a * x2 + jnp.float32(2.77068142495902e-08)
    a = a * x2 + jnp.float32(-2.10102402082508e-06)
    a = a * x2 + jnp.float32(-5.69250639462346e-05)
    a = a * x2 + jnp.float32(-7.34990630326855e-04)
    a = a * x2 + jnp.float32(-2.95459980854025e-03)
    a = a * x2 + jnp.float32(-1.60960333262415e-02)
    a = a * x
    b = jnp.float32(-1.45660718464996e-05)
    b = b * x2 + jnp.float32(-2.13374055278905e-04)
    b = b * x2 + jnp.float32(-1.68282697438203e-03)
    b = b * x2 + jnp.float32(-7.37332916720468e-03)
    b = b * x2 + jnp.float32(-1.42647390514189e-02)
    return a / b


def _gelu_exact(x):
    # PyTorch nn.GELU() default is the exact erf-based GELU.
    return 0.5 * x * (1.0 + _erf_f32(x * jnp.float32(1.0 / math.sqrt(2.0))))


def _layer_norm(x, gamma, beta, eps=1e-5):
    mu = jnp.mean(x, axis=-1, keepdims=True)
    var = jnp.mean(jnp.square(x - mu), axis=-1, keepdims=True)
    return (x - mu) * jax.lax.rsqrt(var + eps) * gamma + beta


def encoder_layer_kernel(num_heads,
                         x_ref, mask_ref,
                         wq_ref, bq_ref, wk_ref, bk_ref, wv_ref, bv_ref,
                         wo_ref, bo_ref, ln1g_ref, ln1b_ref,
                         w1_ref, b1_ref, w2_ref, b2_ref, ln2g_ref, ln2b_ref,
                         out_ref, attn_ref):
    Bb, S, D = x_ref.shape
    dh = D // num_heads

    # ---- fused QKV projections over all Bb*S rows ------------------------
    x2 = x_ref[...].reshape(Bb * S, D)                      # (Bb*S, D)
    inv_sqrt_dh = jnp.float32(1.0 / math.sqrt(dh))
    # fold the 1/sqrt(dh) score scale into q (S*D muls instead of H*S^2)
    q = (jnp.dot(x2, wq_ref[...], preferred_element_type=jnp.float32)
         + bq_ref[...]) * inv_sqrt_dh
    k = jnp.dot(x2, wk_ref[...], preferred_element_type=jnp.float32) + bk_ref[...]
    v = jnp.dot(x2, wv_ref[...], preferred_element_type=jnp.float32) + bv_ref[...]
    q3 = q.reshape(Bb, S, D)
    k3 = k.reshape(Bb, S, D)
    v3 = v.reshape(Bb, S, D)

    pad = mask_ref[...] > 0.5                               # (Bb, 1, S) key pad

    # ---- multi-head self-attention, batched over the Bb sequences --------
    attn_heads = []
    proj_parts = []
    for h in range(num_heads):                              # static loop, H small
        lo, hi = h * dh, (h + 1) * dh
        qh = q3[:, :, lo:hi]                                # (Bb, S, dh)
        kh = k3[:, :, lo:hi]
        vh = v3[:, :, lo:hi]
        # contract on dh directly -- no materialized kh.T transpose
        s_h = jnp.einsum('bqd,bkd->bqk', qh, kh,
                         preferred_element_type=jnp.float32)      # (Bb, S, S)
        s_h = jnp.where(pad, jnp.float32(NEG_INF), s_h)           # masked_fill_
        a_h = jax.nn.softmax(s_h, axis=-1)
        attn_heads.append(a_h)
        ctx_h = jnp.einsum('bqk,bkd->bqd', a_h, vh,
                           preferred_element_type=jnp.float32)    # (Bb, S, dh)
        # fold concat(ctx_heads) @ Wo into a sum of per-head partial matmuls
        # against lane-dense row-slices of Wo (no dh-wide lane concatenate).
        proj_parts.append(
            jnp.dot(ctx_h.reshape(Bb * S, dh), wo_ref[lo:hi, :],
                    preferred_element_type=jnp.float32))
    # one store for the whole attention block of this grid step
    attn_ref[...] = jnp.stack(attn_heads, axis=1)           # (Bb, H, S, S)

    attn_out = functools.reduce(lambda a, b: a + b, proj_parts) + bo_ref[...]
    # TODO(synk): nn.Dropout layers are identity here (eval mode), no RNG applied.
    y = _layer_norm(attn_out + x2, ln1g_ref[...], ln1b_ref[...])   # (Bb*S, D)

    # ---- position-wise feed-forward over all Bb*S rows --------------------
    h1 = _gelu_exact(jnp.dot(y, w1_ref[...], preferred_element_type=jnp.float32)
                     + b1_ref[...])
    ff = jnp.dot(h1, w2_ref[...], preferred_element_type=jnp.float32) + b2_ref[...]
    out = _layer_norm(ff + y, ln2g_ref[...], ln2b_ref[...])
    out_ref[...] = out.reshape(Bb, S, D)


def _pick_batch_block(B, S):
    # Pack as many sequences as practical per grid step so the projection /
    # FFN matmuls have MXU-shaped M (target a few hundred rows), while keeping
    # the (Bb, H, S, S) attention block bounded in VMEM.
    target_rows = 512
    bb = max(1, min(B, target_rows // max(S, 1)))
    while B % bb:
        bb -= 1
    return bb


def encoder_layer(x, mask, p, num_heads):
    B, S, D = x.shape
    dff = p["w1"].shape[1]
    Bb = _pick_batch_block(B, S)
    kern = functools.partial(encoder_layer_kernel, num_heads)
    full2 = lambda b: (0, 0)
    # TODO(synk): at large D/dff the constant-index weight blocks could drop
    # their second pipeline buffer (pl.Buffered(1) / resident VMEM), and all
    # layers could be fused into one pallas_call with a stacked-weight layer
    # grid axis; not needed at these shapes.
    out, attn = pl.pallas_call(
        kern,
        out_shape=(jax.ShapeDtypeStruct((B, S, D), jnp.float32),
                   jax.ShapeDtypeStruct((B, num_heads, S, S), jnp.float32)),
        grid=(B // Bb,),
        in_specs=[
            pl.BlockSpec((Bb, S, D), lambda b: (b, 0, 0)),      # x
            pl.BlockSpec((Bb, 1, S), lambda b: (b, 0, 0)),      # key pad mask
            pl.BlockSpec((D, D), full2), pl.BlockSpec((1, D), full2),     # Wq, bq
            pl.BlockSpec((D, D), full2), pl.BlockSpec((1, D), full2),     # Wk, bk
            pl.BlockSpec((D, D), full2), pl.BlockSpec((1, D), full2),     # Wv, bv
            pl.BlockSpec((D, D), full2), pl.BlockSpec((1, D), full2),     # Wo, bo
            pl.BlockSpec((1, D), full2), pl.BlockSpec((1, D), full2),     # ln1 g, b
            pl.BlockSpec((D, dff), full2), pl.BlockSpec((1, dff), full2), # W1, b1
            pl.BlockSpec((dff, D), full2), pl.BlockSpec((1, D), full2),   # W2, b2
            pl.BlockSpec((1, D), full2), pl.BlockSpec((1, D), full2),     # ln2 g, b
        ],
        out_specs=(pl.BlockSpec((Bb, S, D), lambda b: (b, 0, 0)),
                   pl.BlockSpec((Bb, num_heads, S, S), lambda b: (b, 0, 0, 0))),
        compiler_params=pltpu.CompilerParams(
            dimension_semantics=("parallel",),   # batch blocks are independent
            vmem_limit_bytes=48 * 1024 * 1024),
    )(x, mask,
      p["wq"], p["bq"], p["wk"], p["bk"], p["wv"], p["bv"],
      p["wo"], p["bo"], p["ln1_g"], p["ln1_b"],
      p["w1"], p["b1"], p["w2"], p["b2"], p["ln2_g"], p["ln2_b"])
    return out, attn


def sinusoidal_encoding(max_len, d_model):
    pos = jnp.arange(max_len, dtype=jnp.float32)[:, None]
    _2i = jnp.arange(0, d_model, 2, dtype=jnp.float32)
    angle = pos / jnp.power(10000.0, _2i / d_model)
    pe = jnp.zeros((max_len, d_model), jnp.float32)
    pe = pe.at[:, 0::2].set(jnp.sin(angle))
    pe = pe.at[:, 1::2].set(jnp.cos(angle))
    return pe


def init_params(key, num_layers, d_model, dff, vocab, max_len=200):
    keys = jax.random.split(key, 1 + num_layers)
    params = {
        "emb": jax.random.normal(keys[0], (vocab, d_model), jnp.float32),
        "pos_enc": sinusoidal_encoding(max_len, d_model),
        "layers": [],
    }
    s = 0.02
    for i in range(num_layers):
        lk = jax.random.split(keys[1 + i], 6)
        params["layers"].append(dict(
            wq=s * jax.random.normal(lk[0], (d_model, d_model), jnp.float32),
            bq=jnp.zeros((1, d_model), jnp.float32),
            wk=s * jax.random.normal(lk[1], (d_model, d_model), jnp.float32),
            bk=jnp.zeros((1, d_model), jnp.float32),
            wv=s * jax.random.normal(lk[2], (d_model, d_model), jnp.float32),
            bv=jnp.zeros((1, d_model), jnp.float32),
            wo=s * jax.random.normal(lk[3], (d_model, d_model), jnp.float32),
            bo=jnp.zeros((1, d_model), jnp.float32),
            ln1_g=jnp.ones((1, d_model), jnp.float32),
            ln1_b=jnp.zeros((1, d_model), jnp.float32),
            w1=s * jax.random.normal(lk[4], (d_model, dff), jnp.float32),
            b1=jnp.zeros((1, dff), jnp.float32),
            w2=s * jax.random.normal(lk[5], (dff, d_model), jnp.float32),
            b2=jnp.zeros((1, d_model), jnp.float32),
            ln2_g=jnp.ones((1, d_model), jnp.float32),
            ln2_b=jnp.zeros((1, d_model), jnp.float32),
        ))
    return params


def encoder_forward(tokens, params, num_heads):
    """tokens: [B, S] int32.  Returns (enc_outputs [B,S,D], [attn per layer])."""
    B, S = tokens.shape
    word_emb = jnp.take(params["emb"], tokens, axis=0)           # embedding gather (glue)
    pos_emb = params["pos_enc"][:S][None, :, :]                  # [1, S, D]
    x = word_emb + pos_emb
    # make_src_mask: (src == 0) broadcast over heads & queries -> key pad mask
    mask = (tokens == 0).astype(jnp.float32)[:, None, :]         # [B, 1, S]
    attns = []
    for lp in params["layers"]:
        x, a = encoder_layer(x, mask, lp, num_heads)
        attns.append(a)
    return x, attns


if __name__ == "__main__":
    B, S = 2, 8
    num_layers, d_model, num_heads, dff, vocab = 2, 32, 4, 64, 50

    key = jax.random.PRNGKey(0)
    pkey, tkey = jax.random.split(key)
    params = init_params(pkey, num_layers, d_model, dff, vocab)

    tokens = jax.random.randint(tkey, (B, S), 1, vocab, dtype=jnp.int32)
    tokens = tokens.at[0, 6:].set(0)   # pad tokens -> exercises the attn mask
    tokens = tokens.at[1, 5:].set(0)

    enc_out, enc_attns = encoder_forward(tokens, params, num_heads)
    jax.block_until_ready(enc_out)
    for a in enc_attns:
        jax.block_until_ready(a)

    assert enc_out.shape == (B, S, d_model)
    assert all(a.shape == (B, num_heads, S, S) for a in enc_attns)
    print("KERNEL_OK")
</pallas_src>

<mosaic_0001>
module attributes {stable_mosaic.version = 11 : i64} {
  func.func @encoder_layer_kernel(%arg0: i32, %arg1: memref<2x8x32xf32, #tpu.memory_space<vmem>>, %arg2: memref<2x1x8xf32, #tpu.memory_space<vmem>>, %arg3: memref<32x32xf32, #tpu.memory_space<vmem>>, %arg4: memref<1x32xf32, #tpu.memory_space<vmem>>, %arg5: memref<32x32xf32, #tpu.memory_space<vmem>>, %arg6: memref<1x32xf32, #tpu.memory_space<vmem>>, %arg7: memref<32x32xf32, #tpu.memory_space<vmem>>, %arg8: memref<1x32xf32, #tpu.memory_space<vmem>>, %arg9: memref<32x32xf32, #tpu.memory_space<vmem>>, %arg10: memref<1x32xf32, #tpu.memory_space<vmem>>, %arg11: memref<1x32xf32, #tpu.memory_space<vmem>>, %arg12: memref<1x32xf32, #tpu.memory_space<vmem>>, %arg13: memref<32x64xf32, #tpu.memory_space<vmem>>, %arg14: memref<1x64xf32, #tpu.memory_space<vmem>>, %arg15: memref<64x32xf32, #tpu.memory_space<vmem>>, %arg16: memref<1x32xf32, #tpu.memory_space<vmem>>, %arg17: memref<1x32xf32, #tpu.memory_space<vmem>>, %arg18: memref<1x32xf32, #tpu.memory_space<vmem>>, %arg19: memref<2x8x32xf32, #tpu.memory_space<vmem>>, %arg20: memref<2x4x8x8xf32, #tpu.memory_space<vmem>>) attributes {dimension_semantics = [#tpu.dimension_semantics<parallel>], iteration_bounds = array<i64: 1>, scalar_prefetch = 0 : i64, scratch_operands = 0 : i64, tpu.core_type = #tpu.core_type<tc>, window_params = [{transform_indices = @transform_0, window_bounds = array<i64: 2, 8, 32>}, {transform_indices = @transform_1, window_bounds = array<i64: 2, 1, 8>}, {pipeline_mode = #tpu.pipeline_mode<synchronous>, transform_indices = @transform_2, window_bounds = array<i64: 32, 32>}, {pipeline_mode = #tpu.pipeline_mode<synchronous>, transform_indices = @transform_3, window_bounds = array<i64: 1, 32>}, {pipeline_mode = #tpu.pipeline_mode<synchronous>, transform_indices = @transform_4, window_bounds = array<i64: 32, 32>}, {pipeline_mode = #tpu.pipeline_mode<synchronous>, transform_indices = @transform_5, window_bounds = array<i64: 1, 32>}, {pipeline_mode = #tpu.pipeline_mode<synchronous>, transform_indices = @transform_6, window_bounds = array<i64: 32, 32>}, {pipeline_mode = #tpu.pipeline_mode<synchronous>, transform_indices = @transform_7, window_bounds = array<i64: 1, 32>}, {pipeline_mode = #tpu.pipeline_mode<synchronous>, transform_indices = @transform_8, window_bounds = array<i64: 32, 32>}, {pipeline_mode = #tpu.pipeline_mode<synchronous>, transform_indices = @transform_9, window_bounds = array<i64: 1, 32>}, {pipeline_mode = #tpu.pipeline_mode<synchronous>, transform_indices = @transform_10, window_bounds = array<i64: 1, 32>}, {pipeline_mode = #tpu.pipeline_mode<synchronous>, transform_indices = @transform_11, window_bounds = array<i64: 1, 32>}, {pipeline_mode = #tpu.pipeline_mode<synchronous>, transform_indices = @transform_12, window_bounds = array<i64: 32, 64>}, {pipeline_mode = #tpu.pipeline_mode<synchronous>, transform_indices = @transform_13, window_bounds = array<i64: 1, 64>}, {pipeline_mode = #tpu.pipeline_mode<synchronous>, transform_indices = @transform_14, window_bounds = array<i64: 64, 32>}, {pipeline_mode = #tpu.pipeline_mode<synchronous>, transform_indices = @transform_15, window_bounds = array<i64: 1, 32>}, {pipeline_mode = #tpu.pipeline_mode<synchronous>, transform_indices = @transform_16, window_bounds = array<i64: 1, 32>}, {pipeline_mode = #tpu.pipeline_mode<synchronous>, transform_indices = @transform_17, window_bounds = array<i64: 1, 32>}, {transform_indices = @transform_18, window_bounds = array<i64: 2, 8, 32>}, {transform_indices = @transform_19, window_bounds = array<i64: 2, 4, 8, 8>}]} {
    %c0 = arith.constant 0 : index
    %c0_0 = arith.constant 0 : index
    %c0_1 = arith.constant 0 : index
    %0 = vector.load %arg1[%c0, %c0_0, %c0_1] : memref<2x8x32xf32, #tpu.memory_space<vmem>>, vector<2x8x32xf32>
    %1 = vector.shape_cast %0 : vector<2x8x32xf32> to vector<16x32xf32>
    %c0_2 = arith.constant 0 : index
    %c0_3 = arith.constant 0 : index
    %2 = vector.load %arg3[%c0_2, %c0_3] : memref<32x32xf32, #tpu.memory_space<vmem>>, vector<32x32xf32>
    %cst = arith.constant dense<0.000000e+00> : vector<16x32xf32>
    %3 = tpu.matmul %1, %2, %cst {dimension_numbers = #tpu.dot_dimension_numbers<[1], [0], [0], [1], [0, 0, 1, 1], [], []>} : vector<16x32xf32>, vector<32x32xf32>, vector<16x32xf32> -> vector<16x32xf32>
    %c0_4 = arith.constant 0 : index
    %c0_5 = arith.constant 0 : index
    %4 = vector.load %arg4[%c0_4, %c0_5] : memref<1x32xf32, #tpu.memory_space<vmem>>, vector<1x32xf32>
    %5 = vector.broadcast %4 : vector<1x32xf32> to vector<16x32xf32>
    %6 = arith.addf %3, %5 : vector<16x32xf32>
    %cst_6 = arith.constant 0.353553385 : f32
    %7 = vector.broadcast %cst_6 : f32 to vector<16x32xf32>
    %8 = arith.mulf %6, %7 : vector<16x32xf32>
    %c0_7 = arith.constant 0 : index
    %c0_8 = arith.constant 0 : index
    %9 = vector.load %arg5[%c0_7, %c0_8] : memref<32x32xf32, #tpu.memory_space<vmem>>, vector<32x32xf32>
    %cst_9 = arith.constant dense<0.000000e+00> : vector<16x32xf32>
    %10 = tpu.matmul %1, %9, %cst_9 {dimension_numbers = #tpu.dot_dimension_numbers<[1], [0], [0], [1], [0, 0, 1, 1], [], []>} : vector<16x32xf32>, vector<32x32xf32>, vector<16x32xf32> -> vector<16x32xf32>
    %c0_10 = arith.constant 0 : index
    %c0_11 = arith.constant 0 : index
    %11 = vector.load %arg6[%c0_10, %c0_11] : memref<1x32xf32, #tpu.memory_space<vmem>>, vector<1x32xf32>
    %12 = vector.broadcast %11 : vector<1x32xf32> to vector<16x32xf32>
    %13 = arith.addf %10, %12 : vector<16x32xf32>
    %c0_12 = arith.constant 0 : index
    %c0_13 = arith.constant 0 : index
    %14 = vector.load %arg7[%c0_12, %c0_13] : memref<32x32xf32, #tpu.memory_space<vmem>>, vector<32x32xf32>
    %cst_14 = arith.constant dense<0.000000e+00> : vector<16x32xf32>
    %15 = tpu.matmul %1, %14, %cst_14 {dimension_numbers = #tpu.dot_dimension_numbers<[1], [0], [0], [1], [0, 0, 1, 1], [], []>} : vector<16x32xf32>, vector<32x32xf32>, vector<16x32xf32> -> vector<16x32xf32>
    %c0_15 = arith.constant 0 : index
    %c0_16 = arith.constant 0 : index
    %16 = vector.load %arg8[%c0_15, %c0_16] : memref<1x32xf32, #tpu.memory_space<vmem>>, vector<1x32xf32>
    %17 = vector.broadcast %16 : vector<1x32xf32> to vector<16x32xf32>
    %18 = arith.addf %15, %17 : vector<16x32xf32>
    %19 = vector.shape_cast %8 : vector<16x32xf32> to vector<2x8x32xf32>
    %20 = vector.shape_cast %13 : vector<16x32xf32> to vector<2x8x32xf32>
    %21 = vector.shape_cast %18 : vector<16x32xf32> to vector<2x8x32xf32>
    %c0_17 = arith.constant 0 : index
    %c0_18 = arith.constant 0 : index
    %c0_19 = arith.constant 0 : index
    %22 = vector.load %arg2[%c0_17, %c0_18, %c0_19] : memref<2x1x8xf32, #tpu.memory_space<vmem>>, vector<2x1x8xf32>
    %cst_20 = arith.constant 5.000000e-01 : f32
    %23 = vector.broadcast %cst_20 : f32 to vector<2x1x8xf32>
    %24 = arith.cmpf ogt, %22, %23 : vector<2x1x8xf32>
    %25 = vector.extract_strided_slice %19 {offsets = [0, 0, 0], sizes = [2, 8, 8], strides = [1, 1, 1]} : vector<2x8x32xf32> to vector<2x8x8xf32>
    %26 = vector.extract_strided_slice %20 {offsets = [0, 0, 0], sizes = [2, 8, 8], strides = [1, 1, 1]} : vector<2x8x32xf32> to vector<2x8x8xf32>
    %27 = vector.extract_strided_slice %21 {offsets = [0, 0, 0], sizes = [2, 8, 8], strides = [1, 1, 1]} : vector<2x8x32xf32> to vector<2x8x8xf32>
    "tpu.trace_start"() <{level = 10 : i32, message = "bqd,bkd->bqk"}> : () -> ()
    %cst_21 = arith.constant dense<0.000000e+00> : vector<2x8x8xf32>
    %28 = tpu.matmul %25, %26, %cst_21 {dimension_numbers = #tpu.dot_dimension_numbers<[2], [2], [1], [1], [0, 0, 0, 1, 1, 1], [0], [0]>} : vector<2x8x8xf32>, vector<2x8x8xf32>, vector<2x8x8xf32> -> vector<2x8x8xf32>
    %cst_22 = arith.constant -1.000000e+09 : f32
    "tpu.trace_stop"() : () -> ()
    %29 = vector.shape_cast %24 : vector<2x1x8xi1> to vector<2x1x8xi1>
    %30 = vector.broadcast %29 : vector<2x1x8xi1> to vector<2x8x8xi1>
    %31 = vector.broadcast %cst_22 : f32 to vector<2x8x8xf32>
    %32 = arith.select %30, %31, %28 : vector<2x8x8xi1>, vector<2x8x8xf32>
    %cst_23 = arith.constant dense<0xFF800000> : vector<2x8xf32>
    %33 = vector.multi_reduction <maximumf>, %32, %cst_23 [2] : vector<2x8x8xf32> to vector<2x8xf32>
    %cst_24 = arith.constant 0xFF800000 : f32
    %34 = vector.broadcast %cst_24 : f32 to vector<2x8xf32>
    %35 = arith.maximumf %34, %33 : vector<2x8xf32>
    %36 = vector.shape_cast %35 : vector<2x8xf32> to vector<2x8x1xf32>
    %37 = vector.broadcast %36 : vector<2x8x1xf32> to vector<2x8x8xf32>
    %38 = arith.subf %32, %37 : vector<2x8x8xf32>
    %39 = math.exp %38 : vector<2x8x8xf32>
    %cst_25 = arith.constant dense<0.000000e+00> : vector<2x8xf32>
    %40 = vector.multi_reduction <add>, %39, %cst_25 [2] : vector<2x8x8xf32> to vector<2x8xf32>
    %41 = vector.shape_cast %40 : vector<2x8xf32> to vector<2x8x1xf32>
    %42 = vector.broadcast %41 : vector<2x8x1xf32> to vector<2x8x8xf32>
    %43 = arith.divf %39, %42 : vector<2x8x8xf32>
    "tpu.trace_start"() <{level = 10 : i32, message = "bqk,bkd->bqd"}> : () -> ()
    %cst_26 = arith.constant dense<0.000000e+00> : vector<2x8x8xf32>
    %44 = tpu.matmul %43, %27, %cst_26 {dimension_numbers = #tpu.dot_dimension_numbers<[2], [1], [1], [2], [0, 0, 0, 1, 1, 2], [0], [0]>} : vector<2x8x8xf32>, vector<2x8x8xf32>, vector<2x8x8xf32> -> vector<2x8x8xf32>
    "tpu.trace_stop"() : () -> ()
    %45 = vector.shape_cast %44 : vector<2x8x8xf32> to vector<16x8xf32>
    %c0_27 = arith.constant 0 : index
    %c0_28 = arith.constant 0 : index
    %46 = vector.load %arg9[%c0_27, %c0_28] : memref<32x32xf32, #tpu.memory_space<vmem>>, vector<8x32xf32>
    %cst_29 = arith.constant dense<0.000000e+00> : vector<16x32xf32>
    %47 = tpu.matmul %45, %46, %cst_29 {dimension_numbers = #tpu.dot_dimension_numbers<[1], [0], [0], [1], [0, 0, 1, 1], [], []>} : vector<16x8xf32>, vector<8x32xf32>, vector<16x32xf32> -> vector<16x32xf32>
    %48 = vector.extract_strided_slice %19 {offsets = [0, 0, 8], sizes = [2, 8, 8], strides = [1, 1, 1]} : vector<2x8x32xf32> to vector<2x8x8xf32>
    %49 = vector.extract_strided_slice %20 {offsets = [0, 0, 8], sizes = [2, 8, 8], strides = [1, 1, 1]} : vector<2x8x32xf32> to vector<2x8x8xf32>
    %50 = vector.extract_strided_slice %21 {offsets = [0, 0, 8], sizes = [2, 8, 8], strides = [1, 1, 1]} : vector<2x8x32xf32> to vector<2x8x8xf32>
    "tpu.trace_start"() <{level = 10 : i32, message = "bqd,bkd->bqk"}> : () -> ()
    %cst_30 = arith.constant dense<0.000000e+00> : vector<2x8x8xf32>
    %51 = tpu.matmul %48, %49, %cst_30 {dimension_numbers = #tpu.dot_dimension_numbers<[2], [2], [1], [1], [0, 0, 0, 1, 1, 1], [0], [0]>} : vector<2x8x8xf32>, vector<2x8x8xf32>, vector<2x8x8xf32> -> vector<2x8x8xf32>
    %cst_31 = arith.constant -1.000000e+09 : f32
    "tpu.trace_stop"() : () -> ()
    %52 = vector.shape_cast %24 : vector<2x1x8xi1> to vector<2x1x8xi1>
    %53 = vector.broadcast %52 : vector<2x1x8xi1> to vector<2x8x8xi1>
    %54 = vector.broadcast %cst_31 : f32 to vector<2x8x8xf32>
    %55 = arith.select %53, %54, %51 : vector<2x8x8xi1>, vector<2x8x8xf32>
    %cst_32 = arith.constant dense<0xFF800000> : vector<2x8xf32>
    %56 = vector.multi_reduction <maximumf>, %55, %cst_32 [2] : vector<2x8x8xf32> to vector<2x8xf32>
    %cst_33 = arith.constant 0xFF800000 : f32
    %57 = vector.broadcast %cst_33 : f32 to vector<2x8xf32>
    %58 = arith.maximumf %57, %56 : vector<2x8xf32>
    %59 = vector.shape_cast %58 : vector<2x8xf32> to vector<2x8x1xf32>
    %60 = vector.broadcast %59 : vector<2x8x1xf32> to vector<2x8x8xf32>
    %61 = arith.subf %55, %60 : vector<2x8x8xf32>
    %62 = math.exp %61 : vector<2x8x8xf32>
    %cst_34 = arith.constant dense<0.000000e+00> : vector<2x8xf32>
    %63 = vector.multi_reduction <add>, %62, %cst_34 [2] : vector<2x8x8xf32> to vector<2x8xf32>
    %64 = vector.shape_cast %63 : vector<2x8xf32> to vector<2x8x1xf32>
    %65 = vector.broadcast %64 : vector<2x8x1xf32> to vector<2x8x8xf32>
    %66 = arith.divf %62, %65 : vector<2x8x8xf32>
    "tpu.trace_start"() <{level = 10 : i32, message = "bqk,bkd->bqd"}> : () -> ()
    %cst_35 = arith.constant dense<0.000000e+00> : vector<2x8x8xf32>
    %67 = tpu.matmul %66, %50, %cst_35 {dimension_numbers = #tpu.dot_dimension_numbers<[2], [1], [1], [2], [0, 0, 0, 1, 1, 2], [0], [0]>} : vector<2x8x8xf32>, vector<2x8x8xf32>, vector<2x8x8xf32> -> vector<2x8x8xf32>
    "tpu.trace_stop"() : () -> ()
    %68 = vector.shape_cast %67 : vector<2x8x8xf32> to vector<16x8xf32>
    %c8 = arith.constant 8 : index
    %c0_36 = arith.constant 0 : index
    %69 = vector.load %arg9[%c8, %c0_36] : memref<32x32xf32, #tpu.memory_space<vmem>>, vector<8x32xf32>
    %cst_37 = arith.constant dense<0.000000e+00> : vector<16x32xf32>
    %70 = tpu.matmul %68, %69, %cst_37 {dimension_numbers = #tpu.dot_dimension_numbers<[1], [0], [0], [1], [0, 0, 1, 1], [], []>} : vector<16x8xf32>, vector<8x32xf32>, vector<16x32xf32> -> vector<16x32xf32>
    %71 = vector.extract_strided_slice %19 {offsets = [0, 0, 16], sizes = [2, 8, 8], strides = [1, 1, 1]} : vector<2x8x32xf32> to vector<2x8x8xf32>
    %72 = vector.extract_strided_slice %20 {offsets = [0, 0, 16], sizes = [2, 8, 8], strides = [1, 1, 1]} : vector<2x8x32xf32> to vector<2x8x8xf32>
    %73 = vector.extract_strided_slice %21 {offsets = [0, 0, 16], sizes = [2, 8, 8], strides = [1, 1, 1]} : vector<2x8x32xf32> to vector<2x8x8xf32>
    "tpu.trace_start"() <{level = 10 : i32, message = "bqd,bkd->bqk"}> : () -> ()
    %cst_38 = arith.constant dense<0.000000e+00> : vector<2x8x8xf32>
    %74 = tpu.matmul %71, %72, %cst_38 {dimension_numbers = #tpu.dot_dimension_numbers<[2], [2], [1], [1], [0, 0, 0, 1, 1, 1], [0], [0]>} : vector<2x8x8xf32>, vector<2x8x8xf32>, vector<2x8x8xf32> -> vector<2x8x8xf32>
    %cst_39 = arith.constant -1.000000e+09 : f32
    "tpu.trace_stop"() : () -> ()
    %75 = vector.shape_cast %24 : vector<2x1x8xi1> to vector<2x1x8xi1>
    %76 = vector.broadcast %75 : vector<2x1x8xi1> to vector<2x8x8xi1>
    %77 = vector.broadcast %cst_39 : f32 to vector<2x8x8xf32>
    %78 = arith.select %76, %77, %74 : vector<2x8x8xi1>, vector<2x8x8xf32>
    %cst_40 = arith.constant dense<0xFF800000> : vector<2x8xf32>
    %79 = vector.multi_reduction <maximumf>, %78, %cst_40 [2] : vector<2x8x8xf32> to vector<2x8xf32>
    %cst_41 = arith.constant 0xFF800000 : f32
    %80 = vector.broadcast %cst_41 : f32 to vector<2x8xf32>
    %81 = arith.maximumf %80, %79 : vector<2x8xf32>
    %82 = vector.shape_cast %81 : vector<2x8xf32> to vector<2x8x1xf32>
    %83 = vector.broadcast %82 : vector<2x8x1xf32> to vector<2x8x8xf32>
    %84 = arith.subf %78, %83 : vector<2x8x8xf32>
    %85 = math.exp %84 : vector<2x8x8xf32>
    %cst_42 = arith.constant dense<0.000000e+00> : vector<2x8xf32>
    %86 = vector.multi_reduction <add>, %85, %cst_42 [2] : vector<2x8x8xf32> to vector<2x8xf32>
    %87 = vector.shape_cast %86 : vector<2x8xf32> to vector<2x8x1xf32>
    %88 = vector.broadcast %87 : vector<2x8x1xf32> to vector<2x8x8xf32>
    %89 = arith.divf %85, %88 : vector<2x8x8xf32>
    "tpu.trace_start"() <{level = 10 : i32, message = "bqk,bkd->bqd"}> : () -> ()
    %cst_43 = arith.constant dense<0.000000e+00> : vector<2x8x8xf32>
    %90 = tpu.matmul %89, %73, %cst_43 {dimension_numbers = #tpu.dot_dimension_numbers<[2], [1], [1], [2], [0, 0, 0, 1, 1, 2], [0], [0]>} : vector<2x8x8xf32>, vector<2x8x8xf32>, vector<2x8x8xf32> -> vector<2x8x8xf32>
    "tpu.trace_stop"() : () -> ()
    %91 = vector.shape_cast %90 : vector<2x8x8xf32> to vector<16x8xf32>
    %c16 = arith.constant 16 : index
    %c0_44 = arith.constant 0 : index
    %92 = vector.load %arg9[%c16, %c0_44] : memref<32x32xf32, #tpu.memory_space<vmem>>, vector<8x32xf32>
    %cst_45 = arith.constant dense<0.000000e+00> : vector<16x32xf32>
    %93 = tpu.matmul %91, %92, %cst_45 {dimension_numbers = #tpu.dot_dimension_numbers<[1], [0], [0], [1], [0, 0, 1, 1], [], []>} : vector<16x8xf32>, vector<8x32xf32>, vector<16x32xf32> -> vector<16x32xf32>
    %94 = vector.extract_strided_slice %19 {offsets = [0, 0, 24], sizes = [2, 8, 8], strides = [1, 1, 1]} : vector<2x8x32xf32> to vector<2x8x8xf32>
    %95 = vector.extract_strided_slice %20 {offsets = [0, 0, 24], sizes = [2, 8, 8], strides = [1, 1, 1]} : vector<2x8x32xf32> to vector<2x8x8xf32>
    %96 = vector.extract_strided_slice %21 {offsets = [0, 0, 24], sizes = [2, 8, 8], strides = [1, 1, 1]} : vector<2x8x32xf32> to vector<2x8x8xf32>
    "tpu.trace_start"() <{level = 10 : i32, message = "bqd,bkd->bqk"}> : () -> ()
    %cst_46 = arith.constant dense<0.000000e+00> : vector<2x8x8xf32>
    %97 = tpu.matmul %94, %95, %cst_46 {dimension_numbers = #tpu.dot_dimension_numbers<[2], [2], [1], [1], [0, 0, 0, 1, 1, 1], [0], [0]>} : vector<2x8x8xf32>, vector<2x8x8xf32>, vector<2x8x8xf32> -> vector<2x8x8xf32>
    %cst_47 = arith.constant -1.000000e+09 : f32
    "tpu.trace_stop"() : () -> ()
    %98 = vector.shape_cast %24 : vector<2x1x8xi1> to vector<2x1x8xi1>
    %99 = vector.broadcast %98 : vector<2x1x8xi1> to vector<2x8x8xi1>
    %100 = vector.broadcast %cst_47 : f32 to vector<2x8x8xf32>
    %101 = arith.select %99, %100, %97 : vector<2x8x8xi1>, vector<2x8x8xf32>
    %cst_48 = arith.constant dense<0xFF800000> : vector<2x8xf32>
    %102 = vector.multi_reduction <maximumf>, %101, %cst_48 [2] : vector<2x8x8xf32> to vector<2x8xf32>
    %cst_49 = arith.constant 0xFF800000 : f32
    %103 = vector.broadcast %cst_49 : f32 to vector<2x8xf32>
    %104 = arith.maximumf %103, %102 : vector<2x8xf32>
    %105 = vector.shape_cast %104 : vector<2x8xf32> to vector<2x8x1xf32>
    %106 = vector.broadcast %105 : vector<2x8x1xf32> to vector<2x8x8xf32>
    %107 = arith.subf %101, %106 : vector<2x8x8xf32>
    %108 = math.exp %107 : vector<2x8x8xf32>
    %cst_50 = arith.constant dense<0.000000e+00> : vector<2x8xf32>
    %109 = vector.multi_reduction <add>, %108, %cst_50 [2] : vector<2x8x8xf32> to vector<2x8xf32>
    %110 = vector.shape_cast %109 : vector<2x8xf32> to vector<2x8x1xf32>
    %111 = vector.broadcast %110 : vector<2x8x1xf32> to vector<2x8x8xf32>
    %112 = arith.divf %108, %111 : vector<2x8x8xf32>
    "tpu.trace_start"() <{level = 10 : i32, message = "bqk,bkd->bqd"}> : () -> ()
    %cst_51 = arith.constant dense<0.000000e+00> : vector<2x8x8xf32>
    %113 = tpu.matmul %112, %96, %cst_51 {dimension_numbers = #tpu.dot_dimension_numbers<[2], [1], [1], [2], [0, 0, 0, 1, 1, 2], [0], [0]>} : vector<2x8x8xf32>, vector<2x8x8xf32>, vector<2x8x8xf32> -> vector<2x8x8xf32>
    "tpu.trace_stop"() : () -> ()
    %114 = vector.shape_cast %113 : vector<2x8x8xf32> to vector<16x8xf32>
    %c24 = arith.constant 24 : index
    %c0_52 = arith.constant 0 : index
    %115 = vector.load %arg9[%c24, %c0_52] : memref<32x32xf32, #tpu.memory_space<vmem>>, vector<8x32xf32>
    %cst_53 = arith.constant dense<0.000000e+00> : vector<16x32xf32>
    %116 = tpu.matmul %114, %115, %cst_53 {dimension_numbers = #tpu.dot_dimension_numbers<[1], [0], [0], [1], [0, 0, 1, 1], [], []>} : vector<16x8xf32>, vector<8x32xf32>, vector<16x32xf32> -> vector<16x32xf32>
    %117 = vector.shape_cast %43 : vector<2x8x8xf32> to vector<2x1x8x8xf32>
    %118 = vector.shape_cast %66 : vector<2x8x8xf32> to vector<2x1x8x8xf32>
    %119 = vector.shape_cast %89 : vector<2x8x8xf32> to vector<2x1x8x8xf32>
    %120 = vector.shape_cast %112 : vector<2x8x8xf32> to vector<2x1x8x8xf32>
    %121 = tpu.concatenate %117, %118, %119, %120 in 1 : vector<2x1x8x8xf32>, vector<2x1x8x8xf32>, vector<2x1x8x8xf32>, vector<2x1x8x8xf32> -> vector<2x4x8x8xf32>
    %c0_54 = arith.constant 0 : index
    %c0_55 = arith.constant 0 : index
    %c0_56 = arith.constant 0 : index
    %c0_57 = arith.constant 0 : index
    %122 = vector.load %arg20[%c0_54, %c0_55, %c0_56, %c0_57] : memref<2x4x8x8xf32, #tpu.memory_space<vmem>>, vector<2x4x8x8xf32>
    tpu.vector_store %arg20[%c0_54, %c0_55, %c0_56, %c0_57], %121 {strides = array<i32>} : memref<2x4x8x8xf32, #tpu.memory_space<vmem>>, vector<2x4x8x8xf32>,
    %123 = arith.addf %47, %70 : vector<16x32xf32>
    %124 = arith.addf %123, %93 : vector<16x32xf32>
    %125 = arith.addf %124, %116 : vector<16x32xf32>
    %c0_58 = arith.constant 0 : index
    %c0_59 = arith.constant 0 : index
    %126 = vector.load %arg10[%c0_58, %c0_59] : memref<1x32xf32, #tpu.memory_space<vmem>>, vector<1x32xf32>
    %127 = vector.broadcast %126 : vector<1x32xf32> to vector<16x32xf32>
    %128 = arith.addf %125, %127 : vector<16x32xf32>
    %129 = arith.addf %128, %1 : vector<16x32xf32>
    %c0_60 = arith.constant 0 : index
    %c0_61 = arith.constant 0 : index
    %130 = vector.load %arg11[%c0_60, %c0_61] : memref<1x32xf32, #tpu.memory_space<vmem>>, vector<1x32xf32>
    %c0_62 = arith.constant 0 : index
    %c0_63 = arith.constant 0 : index
    %131 = vector.load %arg12[%c0_62, %c0_63] : memref<1x32xf32, #tpu.memory_space<vmem>>, vector<1x32xf32>
    %cst_64 = arith.constant dense<0.000000e+00> : vector<16xf32>
    %132 = vector.multi_reduction <add>, %129, %cst_64 [1] : vector<16x32xf32> to vector<16xf32>
    %133 = vector.shape_cast %132 : vector<16xf32> to vector<16x1xf32>
    %cst_65 = arith.constant 3.200000e+01 : f32
    %134 = vector.broadcast %cst_65 : f32 to vector<16x1xf32>
    %135 = arith.divf %133, %134 : vector<16x1xf32>
    %136 = vector.broadcast %135 : vector<16x1xf32> to vector<16x32xf32>
    %137 = arith.subf %129, %136 : vector<16x32xf32>
    %138 = arith.mulf %137, %137 : vector<16x32xf32>
    %cst_66 = arith.constant dense<0.000000e+00> : vector<16xf32>
    %139 = vector.multi_reduction <add>, %138, %cst_66 [1] : vector<16x32xf32> to vector<16xf32>
    %140 = vector.shape_cast %139 : vector<16xf32> to vector<16x1xf32>
    %cst_67 = arith.constant 3.200000e+01 : f32
    %141 = vector.broadcast %cst_67 : f32 to vector<16x1xf32>
    %142 = arith.divf %140, %141 : vector<16x1xf32>
    %143 = vector.broadcast %135 : vector<16x1xf32> to vector<16x32xf32>
    %144 = arith.subf %129, %143 : vector<16x32xf32>
    %cst_68 = arith.constant 9.99999974E-6 : f32
    %145 = vector.broadcast %cst_68 : f32 to vector<16x1xf32>
    %146 = arith.addf %142, %145 : vector<16x1xf32>
    %147 = math.rsqrt %146 : vector<16x1xf32>
    %148 = vector.broadcast %147 : vector<16x1xf32> to vector<16x32xf32>
    %149 = arith.mulf %144, %148 : vector<16x32xf32>
    %150 = vector.broadcast %130 : vector<1x32xf32> to vector<16x32xf32>
    %151 = arith.mulf %149, %150 : vector<16x32xf32>
    %152 = vector.broadcast %131 : vector<1x32xf32> to vector<16x32xf32>
    %153 = arith.addf %151, %152 : vector<16x32xf32>
    %c0_69 = arith.constant 0 : index
    %c0_70 = arith.constant 0 : index
    %154 = vector.load %arg13[%c0_69, %c0_70] : memref<32x64xf32, #tpu.memory_space<vmem>>, vector<32x64xf32>
    %cst_71 = arith.constant dense<0.000000e+00> : vector<16x64xf32>
    %155 = tpu.matmul %153, %154, %cst_71 {dimension_numbers = #tpu.dot_dimension_numbers<[1], [0], [0], [1], [0, 0, 1, 1], [], []>} : vector<16x32xf32>, vector<32x64xf32>, vector<16x64xf32> -> vector<16x64xf32>
    %c0_72 = arith.constant 0 : index
    %c0_73 = arith.constant 0 : index
    %156 = vector.load %arg14[%c0_72, %c0_73] : memref<1x64xf32, #tpu.memory_space<vmem>>, vector<1x64xf32>
    %157 = vector.broadcast %156 : vector<1x64xf32> to vector<16x64xf32>
    %158 = arith.addf %155, %157 : vector<16x64xf32>
    %cst_74 = arith.constant 5.000000e-01 : f32
    %159 = vector.broadcast %cst_74 : f32 to vector<16x64xf32>
    %160 = arith.mulf %159, %158 : vector<16x64xf32>
    %cst_75 = arith.constant 0.707106769 : f32
    %161 = vector.broadcast %cst_75 : f32 to vector<16x64xf32>
    %162 = arith.mulf %158, %161 : vector<16x64xf32>
    %cst_76 = arith.constant -4.000000e+00 : f32
    %cst_77 = arith.constant 4.000000e+00 : f32
    %163 = vector.broadcast %cst_76 : f32 to vector<16x64xf32>
    %164 = arith.maximumf %163, %162 : vector<16x64xf32>
    %165 = vector.broadcast %cst_77 : f32 to vector<16x64xf32>
    %166 = arith.minimumf %165, %164 : vector<16x64xf32>
    %167 = arith.mulf %166, %166 : vector<16x64xf32>
    %cst_78 = arith.constant -2.72614237E-10 : f32
    %168 = vector.broadcast %cst_78 : f32 to vector<16x64xf32>
    %169 = arith.mulf %168, %167 : vector<16x64xf32>
    %cst_79 = arith.constant 2.77068146E-8 : f32
    %170 = vector.broadcast %cst_79 : f32 to vector<16x64xf32>
    %171 = arith.addf %169, %170 : vector<16x64xf32>
    %172 = arith.mulf %171, %167 : vector<16x64xf32>
    %cst_80 = arith.constant -2.10102394E-6 : f32
    %173 = vector.broadcast %cst_80 : f32 to vector<16x64xf32>
    %174 = arith.addf %172, %173 : vector<16x64xf32>
    %175 = arith.mulf %174, %167 : vector<16x64xf32>
    %cst_81 = arith.constant -5.69250624E-5 : f32
    %176 = vector.broadcast %cst_81 : f32 to vector<16x64xf32>
    %177 = arith.addf %175, %176 : vector<16x64xf32>
    %178 = arith.mulf %177, %167 : vector<16x64xf32>
    %cst_82 = arith.constant -7.34990637E-4 : f32
    %179 = vector.broadcast %cst_82 : f32 to vector<16x64xf32>
    %180 = arith.addf %178, %179 : vector<16x64xf32>
    %181 = arith.mulf %180, %167 : vector<16x64xf32>
    %cst_83 = arith.constant -2.954600e-03 : f32
    %182 = vector.broadcast %cst_83 : f32 to vector<16x64xf32>
    %183 = arith.addf %181, %182 : vector<16x64xf32>
    %184 = arith.mulf %183, %167 : vector<16x64xf32>
    %cst_84 = arith.constant -0.0160960332 : f32
    %185 = vector.broadcast %cst_84 : f32 to vector<16x64xf32>
    %186 = arith.addf %184, %185 : vector<16x64xf32>
    %187 = arith.mulf %186, %166 : vector<16x64xf32>
    %cst_85 = arith.constant -1.45660715E-5 : f32
    %188 = vector.broadcast %cst_85 : f32 to vector<16x64xf32>
    %189 = arith.mulf %188, %167 : vector<16x64xf32>
    %cst_86 = arith.constant -2.13374049E-4 : f32
    %190 = vector.broadcast %cst_86 : f32 to vector<16x64xf32>
    %191 = arith.addf %189, %190 : vector<16x64xf32>
    %192 = arith.mulf %191, %167 : vector<16x64xf32>
    %cst_87 = arith.constant -0.00168282702 : f32
    %193 = vector.broadcast %cst_87 : f32 to vector<16x64xf32>
    %194 = arith.addf %192, %193 : vector<16x64xf32>
    %195 = arith.mulf %194, %167 : vector<16x64xf32>
    %cst_88 = arith.constant -0.00737332925 : f32
    %196 = vector.broadcast %cst_88 : f32 to vector<16x64xf32>
    %197 = arith.addf %195, %196 : vector<16x64xf32>
    %198 = arith.mulf %197, %167 : vector<16x64xf32>
    %cst_89 = arith.constant -0.0142647391 : f32
    %199 = vector.broadcast %cst_89 : f32 to vector<16x64xf32>
    %200 = arith.addf %198, %199 : vector<16x64xf32>
    %201 = arith.divf %187, %200 : vector<16x64xf32>
    %cst_90 = arith.constant 1.000000e+00 : f32
    %202 = vector.broadcast %cst_90 : f32 to vector<16x64xf32>
    %203 = arith.addf %202, %201 : vector<16x64xf32>
    %204 = arith.mulf %160, %203 : vector<16x64xf32>
    %c0_91 = arith.constant 0 : index
    %c0_92 = arith.constant 0 : index
    %205 = vector.load %arg15[%c0_91, %c0_92] : memref<64x32xf32, #tpu.memory_space<vmem>>, vector<64x32xf32>
    %cst_93 = arith.constant dense<0.000000e+00> : vector<16x32xf32>
    %206 = tpu.matmul %204, %205, %cst_93 {dimension_numbers = #tpu.dot_dimension_numbers<[1], [0], [0], [1], [0, 0, 1, 1], [], []>} : vector<16x64xf32>, vector<64x32xf32>, vector<16x32xf32> -> vector<16x32xf32>
    %c0_94 = arith.constant 0 : index
    %c0_95 = arith.constant 0 : index
    %207 = vector.load %arg16[%c0_94, %c0_95] : memref<1x32xf32, #tpu.memory_space<vmem>>, vector<1x32xf32>
    %208 = vector.broadcast %207 : vector<1x32xf32> to vector<16x32xf32>
    %209 = arith.addf %206, %208 : vector<16x32xf32>
    %210 = arith.addf %209, %153 : vector<16x32xf32>
    %c0_96 = arith.constant 0 : index
    %c0_97 = arith.constant 0 : index
    %211 = vector.load %arg17[%c0_96, %c0_97] : memref<1x32xf32, #tpu.memory_space<vmem>>, vector<1x32xf32>
    %c0_98 = arith.constant 0 : index
    %c0_99 = arith.constant 0 : index
    %212 = vector.load %arg18[%c0_98, %c0_99] : memref<1x32xf32, #tpu.memory_space<vmem>>, vector<1x32xf32>
    %cst_100 = arith.constant dense<0.000000e+00> : vector<16xf32>
    %213 = vector.multi_reduction <add>, %210, %cst_100 [1] : vector<16x32xf32> to vector<16xf32>
    %214 = vector.shape_cast %213 : vector<16xf32> to vector<16x1xf32>
    %cst_101 = arith.constant 3.200000e+01 : f32
    %215 = vector.broadcast %cst_101 : f32 to vector<16x1xf32>
    %216 = arith.divf %214, %215 : vector<16x1xf32>
    %217 = vector.broadcast %216 : vector<16x1xf32> to vector<16x32xf32>
    %218 = arith.subf %210, %217 : vector<16x32xf32>
    %219 = arith.mulf %218, %218 : vector<16x32xf32>
    %cst_102 = arith.constant dense<0.000000e+00> : vector<16xf32>
    %220 = vector.multi_reduction <add>, %219, %cst_102 [1] : vector<16x32xf32> to vector<16xf32>
    %221 = vector.shape_cast %220 : vector<16xf32> to vector<16x1xf32>
    %cst_103 = arith.constant 3.200000e+01 : f32
    %222 = vector.broadcast %cst_103 : f32 to vector<16x1xf32>
    %223 = arith.divf %221, %222 : vector<16x1xf32>
    %224 = vector.broadcast %216 : vector<16x1xf32> to vector<16x32xf32>
    %225 = arith.subf %210, %224 : vector<16x32xf32>
    %cst_104 = arith.constant 9.99999974E-6 : f32
    %226 = vector.broadcast %cst_104 : f32 to vector<16x1xf32>
    %227 = arith.addf %223, %226 : vector<16x1xf32>
    %228 = math.rsqrt %227 : vector<16x1xf32>
    %229 = vector.broadcast %228 : vector<16x1xf32> to vector<16x32xf32>
    %230 = arith.mulf %225, %229 : vector<16x32xf32>
    %231 = vector.broadcast %211 : vector<1x32xf32> to vector<16x32xf32>
    %232 = arith.mulf %230, %231 : vector<16x32xf32>
    %233 = vector.broadcast %212 : vector<1x32xf32> to vector<16x32xf32>
    %234 = arith.addf %232, %233 : vector<16x32xf32>
    %235 = vector.shape_cast %234 : vector<16x32xf32> to vector<2x8x32xf32>
    %c0_105 = arith.constant 0 : index
    %c0_106 = arith.constant 0 : index
    %c0_107 = arith.constant 0 : index
    %236 = vector.load %arg19[%c0_105, %c0_106, %c0_107] : memref<2x8x32xf32, #tpu.memory_space<vmem>>, vector<2x8x32xf32>
    tpu.vector_store %arg19[%c0_105, %c0_106, %c0_107], %235 {strides = array<i32>} : memref<2x8x32xf32, #tpu.memory_space<vmem>>, vector<2x8x32xf32>,
    return
  }
  func.func @transform_0(%arg0: i32) -> (i32, i32, i32) {
    %c0_i32 = arith.constant 0 : i32
    %c0_i32_0 = arith.constant 0 : i32
    %c0_i32_1 = arith.constant 0 : i32
    return %arg0, %c0_i32, %c0_i32_0 : i32, i32, i32
  }
  func.func @transform_1(%arg0: i32) -> (i32, i32, i32) {
    %c0_i32 = arith.constant 0 : i32
    %c0_i32_0 = arith.constant 0 : i32
    %c0_i32_1 = arith.constant 0 : i32
    return %arg0, %c0_i32, %c0_i32_0 : i32, i32, i32
  }
  func.func @transform_2(%arg0: i32) -> (i32, i32) {
    %c0_i32 = arith.constant 0 : i32
    %c0_i32_0 = arith.constant 0 : i32
    %c0_i32_1 = arith.constant 0 : i32
    return %c0_i32, %c0_i32_0 : i32, i32
  }
  func.func @transform_3(%arg0: i32) -> (i32, i32) {
    %c0_i32 = arith.constant 0 : i32
    %c0_i32_0 = arith.constant 0 : i32
    %c0_i32_1 = arith.constant 0 : i32
    return %c0_i32, %c0_i32_0 : i32, i32
  }
  func.func @transform_4(%arg0: i32) -> (i32, i32) {
    %c0_i32 = arith.constant 0 : i32
    %c0_i32_0 = arith.constant 0 : i32
    %c0_i32_1 = arith.constant 0 : i32
    return %c0_i32, %c0_i32_0 : i32, i32
  }
  func.func @transform_5(%arg0: i32) -> (i32, i32) {
    %c0_i32 = arith.constant 0 : i32
    %c0_i32_0 = arith.constant 0 : i32
    %c0_i32_1 = arith.constant 0 : i32
    return %c0_i32, %c0_i32_0 : i32, i32
  }
  func.func @transform_6(%arg0: i32) -> (i32, i32) {
    %c0_i32 = arith.constant 0 : i32
    %c0_i32_0 = arith.constant 0 : i32
    %c0_i32_1 = arith.constant 0 : i32
    return %c0_i32, %c0_i32_0 : i32, i32
  }
  func.func @transform_7(%arg0: i32) -> (i32, i32) {
    %c0_i32 = arith.constant 0 : i32
    %c0_i32_0 = arith.constant 0 : i32
    %c0_i32_1 = arith.constant 0 : i32
    return %c0_i32, %c0_i32_0 : i32, i32
  }
  func.func @transform_8(%arg0: i32) -> (i32, i32) {
    %c0_i32 = arith.constant 0 : i32
    %c0_i32_0 = arith.constant 0 : i32
    %c0_i32_1 = arith.constant 0 : i32
    return %c0_i32, %c0_i32_0 : i32, i32
  }
  func.func @transform_9(%arg0: i32) -> (i32, i32) {
    %c0_i32 = arith.constant 0 : i32
    %c0_i32_0 = arith.constant 0 : i32
    %c0_i32_1 = arith.constant 0 : i32
    return %c0_i32, %c0_i32_0 : i32, i32
  }
  func.func @transform_10(%arg0: i32) -> (i32, i32) {
    %c0_i32 = arith.constant 0 : i32
    %c0_i32_0 = arith.constant 0 : i32
    %c0_i32_1 = arith.constant 0 : i32
    return %c0_i32, %c0_i32_0 : i32, i32
  }
  func.func @transform_11(%arg0: i32) -> (i32, i32) {
    %c0_i32 = arith.constant 0 : i32
    %c0_i32_0 = arith.constant 0 : i32
    %c0_i32_1 = arith.constant 0 : i32
    return %c0_i32, %c0_i32_0 : i32, i32
  }
  func.func @transform_12(%arg0: i32) -> (i32, i32) {
    %c0_i32 = arith.constant 0 : i32
    %c0_i32_0 = arith.constant 0 : i32
    %c0_i32_1 = arith.constant 0 : i32
    return %c0_i32, %c0_i32_0 : i32, i32
  }
  func.func @transform_13(%arg0: i32) -> (i32, i32) {
    %c0_i32 = arith.constant 0 : i32
    %c0_i32_0 = arith.constant 0 : i32
    %c0_i32_1 = arith.constant 0 : i32
    return %c0_i32, %c0_i32_0 : i32, i32
  }
  func.func @transform_14(%arg0: i32) -> (i32, i32) {
    %c0_i32 = arith.constant 0 : i32
    %c0_i32_0 = arith.constant 0 : i32
    %c0_i32_1 = arith.constant 0 : i32
    return %c0_i32, %c0_i32_0 : i32, i32
  }
  func.func @transform_15(%arg0: i32) -> (i32, i32) {
    %c0_i32 = arith.constant 0 : i32
    %c0_i32_0 = arith.constant 0 : i32
    %c0_i32_1 = arith.constant 0 : i32
    return %c0_i32, %c0_i32_0 : i32, i32
  }
  func.func @transform_16(%arg0: i32) -> (i32, i32) {
    %c0_i32 = arith.constant 0 : i32
    %c0_i32_0 = arith.constant 0 : i32
    %c0_i32_1 = arith.constant 0 : i32
    return %c0_i32, %c0_i32_0 : i32, i32
  }
  func.func @transform_17(%arg0: i32) -> (i32, i32) {
    %c0_i32 = arith.constant 0 : i32
    %c0_i32_0 = arith.constant 0 : i32
    %c0_i32_1 = arith.constant 0 : i32
    return %c0_i32, %c0_i32_0 : i32, i32
  }
  func.func @transform_18(%arg0: i32) -> (i32, i32, i32) {
    %c0_i32 = arith.constant 0 : i32
    %c0_i32_0 = arith.constant 0 : i32
    %c0_i32_1 = arith.constant 0 : i32
    return %arg0, %c0_i32, %c0_i32_0 : i32, i32, i32
  }
  func.func @transform_19(%arg0: i32) -> (i32, i32, i32, i32) {
    %c0_i32 = arith.constant 0 : i32
    %c0_i32_0 = arith.constant 0 : i32
    %c0_i32_1 = arith.constant 0 : i32
    %c0_i32_2 = arith.constant 0 : i32
    return %arg0, %c0_i32, %c0_i32_0, %c0_i32_1 : i32, i32, i32, i32
  }
}

</mosaic_0001>

<llo_original>
// kernel: tpu_custom_call.1
$region0: #{tpu_custom_call.1}
  #allocation0 [shape = 'u32[]', space=smem, size = 0x4, offset = 0x4, fixed_abs, tag = 'smem constant byte address 0x4 - core index']
  #allocation1 [shape = 'u32[72,128]{1,0:T(1,128)}', space=vmem, size = 0x9000, scoped, tag = 'internal scratch']
  %s0 = inlined_call_operand.hbm [shape: f32[2,8,32], index: 0, kind: input, shape index: {}]
  %s1 = inlined_call_operand.hbm [shape: f32[2,1,8], index: 1, kind: input, shape index: {}]
  %s2 = inlined_call_operand.vmem [shape: f32[32,32], index: 2, kind: input, shape index: {}]
  %s3 = inlined_call_operand.vmem [shape: f32[1,32], index: 3, kind: input, shape index: {}]
  %s4 = inlined_call_operand.vmem [shape: f32[32,32], index: 4, kind: input, shape index: {}]
  %s5 = inlined_call_operand.vmem [shape: f32[1,32], index: 5, kind: input, shape index: {}]
  %s6 = inlined_call_operand.vmem [shape: f32[32,32], index: 6, kind: input, shape index: {}]
  %s7 = inlined_call_operand.vmem [shape: f32[1,32], index: 7, kind: input, shape index: {}]
  %s8 = inlined_call_operand.hbm [shape: f32[32,32], index: 8, kind: input, shape index: {}]
  %s9 = inlined_call_operand.vmem [shape: f32[1,32], index: 9, kind: input, shape index: {}]
  %s10 = inlined_call_operand.vmem [shape: f32[1,32], index: 10, kind: input, shape index: {}]
  %s11 = inlined_call_operand.vmem [shape: f32[1,32], index: 11, kind: input, shape index: {}]
  %s12 = inlined_call_operand.hbm [shape: f32[32,64], index: 12, kind: input, shape index: {}]
  %s13 = inlined_call_operand.vmem [shape: f32[1,64], index: 13, kind: input, shape index: {}]
  %s14 = inlined_call_operand.vmem [shape: f32[64,32], index: 14, kind: input, shape index: {}]
  %s15 = inlined_call_operand.vmem [shape: f32[1,32], index: 15, kind: input, shape index: {}]
  %s16 = inlined_call_operand.vmem [shape: f32[1,32], index: 16, kind: input, shape index: {}]
  %s17 = inlined_call_operand.vmem [shape: f32[1,32], index: 17, kind: input, shape index: {}]
  %s18 = inlined_call_operand.hbm [shape: f32[2,8,32], index: 18, kind: output, shape index: {0}]
  %s19 = inlined_call_operand.hbm [shape: f32[2,4,8,8], index: 19, kind: output, shape index: {1}]
  %20 = xla_tuple %s18, %s19
  %s21 = sld [smem:[#allocation0]]
  $region106: #{tpu_custom_call.1} parent=0
    _
  %s23 = ssub.s32 1, %s21
  %s24 = scalar_select 0, %s23, %s21
  $region1: #{tpu_custom_call.1} parent=0
    #allocation2 [shape = 'u8[8192]{0}', space=vmem, size = 0x2000, scoped, tag = 'input window, operand 0, single buffered']
    #allocation3 [shape = 's32[1]{0}', space=sflag, size = 0x4, scoped, tag = 'scoped memory for tpu_custom_call.1']
    #allocation4 [shape = 's32[1]{0}', space=sflag, size = 0x4, scoped, tag = 'scoped memory for tpu_custom_call.1']
    #allocation5 [shape = 'u8[1024]{0}', space=vmem, size = 0x400, scoped, tag = 'input window, operand 1, single buffered']
    #allocation6 [shape = 's32[1]{0}', space=sflag, size = 0x4, scoped, tag = 'scoped memory for tpu_custom_call.1']
    #allocation7 [shape = 'u8[16384]{0}', space=vmem, size = 0x4000, scoped, tag = 'input window, operand 8, single buffered']
    #allocation8 [shape = 'u8[16384]{0}', space=vmem, size = 0x4000, scoped, tag = 'input window, operand 12, single buffered']
    #allocation9 [shape = 's32[1]{0}', space=sflag, size = 0x4, scoped, tag = 'scoped memory for tpu_custom_call.1']
    #allocation10 [shape = 'u8[8192]{0}', space=vmem, size = 0x2000, scoped, tag = 'output window, operand 0, single buffered']
    #allocation11 [shape = 'u8[32768]{0}', space=vmem, size = 0x8000, scoped, tag = 'output window, operand 1, single buffered']
    #allocation12 [shape = 's32[1]{0}', space=sflag, size = 0x4, scoped, tag = 'scoped memory for tpu_custom_call.1']
    %25 = vsyncpa [#allocation3], 0
    %26 = vsyncpa [#allocation6], 0
    %27 = vsyncpa [#allocation9], 0
    %28 = vsyncpa [#allocation4], 0
    %29 = vsyncpa [#allocation12], 0
    // Predicated region
    $region2: #{tpu_custom_call.1} parent=1 // pred_check
      _
    $region3: #{tpu_custom_call.1} parent=1 // pred_check_branch
      %31 = sbr.rel (0) target = $region5
    $region4: #{tpu_custom_call.1} parent=1 // pred_region
      %33 = vsyncadd [#allocation3], 0
      %s34 = sshll.u32 %s0, 4
      %s35 = int_to_ptr.hbm [resolvable:$true] %s34
      %s36 = sshll.u32 [#allocation2], 4
      %s37 = int_to_ptr.vmem [resolvable:$true] %s36
      %42 = dma.hbm_to_vmem [thread:$0]  %s35, 256, %s37, [#allocation3], 128, 128, 8
    $region5: #{tpu_custom_call.1} parent=1 // pred_fallthru
      _
    // Predicated region
    $region6: #{tpu_custom_call.1} parent=1 // pred_check
      _
    $region7: #{tpu_custom_call.1} parent=1 // pred_check_branch
      %44 = sbr.rel (0) target = $region9
    $region8: #{tpu_custom_call.1} parent=1 // pred_region
      %46 = vsyncadd [#allocation6], 0
      %s47 = sshll.u32 %s1, 4
      %s48 = int_to_ptr.hbm [resolvable:$true] %s47
      %s49 = sshll.u32 [#allocation5], 4
      %s50 = int_to_ptr.vmem [resolvable:$true] %s49
      %55 = dma.hbm_to_vmem [thread:$0]  %s48, 32, %s50, [#allocation6], 16, 16, 1
    $region9: #{tpu_custom_call.1} parent=1 // pred_fallthru
      _
    // Predicated region
    $region10: #{tpu_custom_call.1} parent=1 // pred_check
      _
    $region11: #{tpu_custom_call.1} parent=1 // pred_check_branch
      %57 = sbr.rel (0) target = $region13
    $region12: #{tpu_custom_call.1} parent=1 // pred_region
      _
    $region13: #{tpu_custom_call.1} parent=1 // pred_fallthru
      _
    // Predicated region
    $region14: #{tpu_custom_call.1} parent=1 // pred_check
      _
    $region15: #{tpu_custom_call.1} parent=1 // pred_check_branch
      %59 = sbr.rel (0) target = $region17
    $region16: #{tpu_custom_call.1} parent=1 // pred_region
      _
    $region17: #{tpu_custom_call.1} parent=1 // pred_fallthru
      _
    // Predicated region
    $region18: #{tpu_custom_call.1} parent=1 // pred_check
      _
    $region19: #{tpu_custom_call.1} parent=1 // pred_check_branch
      %61 = sbr.rel (0) target = $region21
    $region20: #{tpu_custom_call.1} parent=1 // pred_region
      _
    $region21: #{tpu_custom_call.1} parent=1 // pred_fallthru
      _
    // Predicated region
    $region22: #{tpu_custom_call.1} parent=1 // pred_check
      _
    $region23: #{tpu_custom_call.1} parent=1 // pred_check_branch
      %63 = sbr.rel (0) target = $region25
    $region24: #{tpu_custom_call.1} parent=1 // pred_region
      _
    $region25: #{tpu_custom_call.1} parent=1 // pred_fallthru
      _
    // Predicated region
    $region26: #{tpu_custom_call.1} parent=1 // pred_check
      _
    $region27: #{tpu_custom_call.1} parent=1 // pred_check_branch
      %65 = sbr.rel (0) target = $region29
    $region28: #{tpu_custom_call.1} parent=1 // pred_region
      _
    $region29: #{tpu_custom_call.1} parent=1 // pred_fallthru
      _
    // Predicated region
    $region30: #{tpu_custom_call.1} parent=1 // pred_check
      _
    $region31: #{tpu_custom_call.1} parent=1 // pred_check_branch
      %67 = sbr.rel (0) target = $region33
    $region32: #{tpu_custom_call.1} parent=1 // pred_region
      _
    $region33: #{tpu_custom_call.1} parent=1 // pred_fallthru
      _
    // Predicated region
    $region34: #{tpu_custom_call.1} parent=1 // pred_check
      _
    $region35: #{tpu_custom_call.1} parent=1 // pred_check_branch
      %69 = sbr.rel (0) target = $region37
    $region36: #{tpu_custom_call.1} parent=1 // pred_region
      %71 = vsyncadd [#allocation6], 0
      %s72 = sshll.u32 %s8, 4
      %s73 = int_to_ptr.hbm [resolvable:$true] %s72
      %s74 = sshll.u32 [#allocation7], 4
      %s75 = int_to_ptr.vmem [resolvable:$true] %s74
      %80 = dma.hbm_to_vmem [thread:$0]  %s73, 512, %s75, [#allocation6], 128, 128, 8
    $region37: #{tpu_custom_call.1} parent=1 // pred_fallthru
      _
    // Predicated region
    $region38: #{tpu_custom_call.1} parent=1 // pred_check
      _
    $region39: #{tpu_custom_call.1} parent=1 // pred_check_branch
      %82 = sbr.rel (0) target = $region41
    $region40: #{tpu_custom_call.1} parent=1 // pred_region
      _
    $region41: #{tpu_custom_call.1} parent=1 // pred_fallthru
      _
    // Predicated region
    $region42: #{tpu_custom_call.1} parent=1 // pred_check
      _
    $region43: #{tpu_custom_call.1} parent=1 // pred_check_branch
      %84 = sbr.rel (0) target = $region45
    $region44: #{tpu_custom_call.1} parent=1 // pred_region
      _
    $region45: #{tpu_custom_call.1} parent=1 // pred_fallthru
      _
    // Predicated region
    $region46: #{tpu_custom_call.1} parent=1 // pred_check
      _
    $region47: #{tpu_custom_call.1} parent=1 // pred_check_branch
      %86 = sbr.rel (0) target = $region49
    $region48: #{tpu_custom_call.1} parent=1 // pred_region
      _
    $region49: #{tpu_custom_call.1} parent=1 // pred_fallthru
      _
    // Predicated region
    $region50: #{tpu_custom_call.1} parent=1 // pred_check
      _
    $region51: #{tpu_custom_call.1} parent=1 // pred_check_branch
      %88 = sbr.rel (0) target = $region53
    $region52: #{tpu_custom_call.1} parent=1 // pred_region
      %90 = vsyncadd [#allocation9], 0
      %s91 = sshll.u32 %s12, 4
      %s92 = int_to_ptr.hbm [resolvable:$true] %s91
      %s93 = sshll.u32 [#allocation8], 4
      %s94 = int_to_ptr.vmem [resolvable:$true] %s93
      %99 = dma.hbm_to_vmem [thread:$0]  %s92, 512, %s94, [#allocation9], 128, 128, 8
    $region53: #{tpu_custom_call.1} parent=1 // pred_fallthru
      _
    // Predicated region
    $region54: #{tpu_custom_call.1} parent=1 // pred_check
      _
    $region55: #{tpu_custom_call.1} parent=1 // pred_check_branch
      %101 = sbr.rel (0) target = $region57
    $region56: #{tpu_custom_call.1} parent=1 // pred_region
      _
    $region57: #{tpu_custom_call.1} parent=1 // pred_fallthru
      _
    // Predicated region
    $region58: #{tpu_custom_call.1} parent=1 // pred_check
      _
    $region59: #{tpu_custom_call.1} parent=1 // pred_check_branch
      %103 = sbr.rel (0) target = $region61
    $region60: #{tpu_custom_call.1} parent=1 // pred_region
      _
    $region61: #{tpu_custom_call.1} parent=1 // pred_fallthru
      _
    // Predicated region
    $region62: #{tpu_custom_call.1} parent=1 // pred_check
      _
    $region63: #{tpu_custom_call.1} parent=1 // pred_check_branch
      %105 = sbr.rel (0) target = $region65
    $region64: #{tpu_custom_call.1} parent=1 // pred_region
      _
    $region65: #{tpu_custom_call.1} parent=1 // pred_fallthru
      _
    // Predicated region
    $region66: #{tpu_custom_call.1} parent=1 // pred_check
      _
    $region67: #{tpu_custom_call.1} parent=1 // pred_check_branch
      %107 = sbr.rel (0) target = $region69
    $region68: #{tpu_custom_call.1} parent=1 // pred_region
      _
    $region69: #{tpu_custom_call.1} parent=1 // pred_fallthru
      _
    // Predicated region
    $region70: #{tpu_custom_call.1} parent=1 // pred_check
      _
    $region71: #{tpu_custom_call.1} parent=1 // pred_check_branch
      %109 = sbr.rel (0) target = $region73
    $region72: #{tpu_custom_call.1} parent=1 // pred_region
      _
    $region73: #{tpu_custom_call.1} parent=1 // pred_fallthru
      _
    // Predicated region
    $region74: #{tpu_custom_call.1} parent=1 // pred_check
      _
    $region75: #{tpu_custom_call.1} parent=1 // pred_check_branch
      %111 = sbr.rel (0) target = $region77
    $region76: #{tpu_custom_call.1} parent=1 // pred_region
      %113 = dma.done [#allocation3], 256
    $region77: #{tpu_custom_call.1} parent=1 // pred_fallthru
      _
    // Predicated region
    $region78: #{tpu_custom_call.1} parent=1 // pred_check
      _
    $region79: #{tpu_custom_call.1} parent=1 // pred_check_branch
      %115 = sbr.rel (0) target = $region81
    $region80: #{tpu_custom_call.1} parent=1 // pred_region
      %117 = dma.done [#allocation6], 32
    $region81: #{tpu_custom_call.1} parent=1 // pred_fallthru
      _
    // Predicated region
    $region82: #{tpu_custom_call.1} parent=1 // pred_check
      _
    $region83: #{tpu_custom_call.1} parent=1 // pred_check_branch
      %119 = sbr.rel (0) target = $region85
    $region84: #{tpu_custom_call.1} parent=1 // pred_region
      %121 = dma.done [#allocation6], 512
    $region85: #{tpu_custom_call.1} parent=1 // pred_fallthru
      _
    // Predicated region
    $region86: #{tpu_custom_call.1} parent=1 // pred_check
      _
    $region87: #{tpu_custom_call.1} parent=1 // pred_check_branch
      %123 = sbr.rel (0) target = $region89
    $region88: #{tpu_custom_call.1} parent=1 // pred_region
      %125 = dma.done [#allocation9], 512
    $region89: #{tpu_custom_call.1} parent=1 // pred_fallthru
      _
    %v126 = vld [vmem:[#allocation2] sm:$0xff]
    %v127 = vld [vmem:[#allocation2 + $0x8] sm:$0xff]
    %v128 = vld [vmem:[%s2] sm:$0xff]
    %v129 = vld [vmem:[%s2 + $0x8] sm:$0xff]
    %v130 = vld [vmem:[%s2 + $0x10] sm:$0xff]
    %v131 = vld [vmem:[%s2 + $0x18] sm:$0xff]
    %v132 = vld [vmem:[%s3] sm:$0x1]
    %v134 = vperm.slane %v132, 0
    %vm136 = vcmask 261120
    %v138 = vsel %vm136, %v126, 0
    %v141 = vsel %vm136, %v127, 0
    %143 = vmatpush.msra.mxu0 0.0
    %144 = vmatpush.msra.mxu0 0.0
    %145 = vmatpush.msra.mxu0 0.0
    %146 = vmatpush.msra.mxu0 0.0
    %147 = vmatpush.msra.mxu0 0.0
    %148 = vmatpush.msra.mxu0 0.0
    %149 = vmatpush.msra.mxu0 0.0
    %150 = vmatpush.msra.mxu0 0.0
    %151 = vmatpush.msra.mxu0 0.0
    %152 = vmatpush.msra.mxu0 0.0
    %153 = vmatpush.msra.mxu0 0.0
    %154 = vmatpush.msra.mxu0 0.0
    %155 = vmatpush.msra.mxu0 %v131
    %156 = vmatpush.msra.mxu0 %v130
    %157 = vmatpush.msra.mxu0 %v129
    %158 = vmatpush.msra.mxu0 %v128
    %159 = vmatmul.f32.gmra.mxu0 %v138
    %v160 = vpop.f32.mrf.mxu0
    %v161 = vadd.f32 %v134, %v160
    %162 = vmatmul.f32.gmra.mxu0 %v141
    %v163 = vpop.f32.mrf.mxu0
    %v164 = vadd.f32 %v134, %v163
    %165 = vdwg.mxu0
    %v166 = vmul.f32 %v161, 0.35355338
    %v167 = vmul.f32 %v164, 0.35355338
    %v168 = vld [vmem:[%s4] sm:$0xff]
    %v169 = vld [vmem:[%s4 + $0x8] sm:$0xff]
    %v170 = vld [vmem:[%s4 + $0x10] sm:$0xff]
    %v171 = vld [vmem:[%s4 + $0x18] sm:$0xff]
    %v172 = vld [vmem:[%s5] sm:$0x1]
    %v174 = vperm.slane %v172, 0
    %176 = vmatpush.msra.mxu0 0.0
    %177 = vmatpush.msra.mxu0 0.0
    %178 = vmatpush.msra.mxu0 0.0
    %179 = vmatpush.msra.mxu0 0.0
    %180 = vmatpush.msra.mxu0 0.0
    %181 = vmatpush.msra.mxu0 0.0
    %182 = vmatpush.msra.mxu0 0.0
    %183 = vmatpush.msra.mxu0 0.0
    %184 = vmatpush.msra.mxu0 0.0
    %185 = vmatpush.msra.mxu0 0.0
    %186 = vmatpush.msra.mxu0 0.0
    %187 = vmatpush.msra.mxu0 0.0
    %188 = vmatpush.msra.mxu0 %v171
    %189 = vmatpush.msra.mxu0 %v170
    %190 = vmatpush.msra.mxu0 %v169
    %191 = vmatpush.msra.mxu0 %v168
    %192 = vmatmul.f32.gmra.mxu0 %v138
    %v193 = vpop.f32.mrf.mxu0
    %v194 = vadd.f32 %v174, %v193
    %195 = vmatmul.f32.gmra.mxu0 %v141
    %v196 = vpop.f32.mrf.mxu0
    %v197 = vadd.f32 %v174, %v196
    %198 = vdwg.mxu0
    %v199 = vld [vmem:[%s6] sm:$0xff]
    %v200 = vld [vmem:[%s6 + $0x8] sm:$0xff]
    %v201 = vld [vmem:[%s6 + $0x10] sm:$0xff]
    %v202 = vld [vmem:[%s6 + $0x18] sm:$0xff]
    %v203 = vld [vmem:[%s7] sm:$0x1]
    %v205 = vperm.slane %v203, 0
    %207 = vmatpush.msra.mxu0 0.0
    %208 = vmatpush.msra.mxu0 0.0
    %209 = vmatpush.msra.mxu0 0.0
    %210 = vmatpush.msra.mxu0 0.0
    %211 = vmatpush.msra.mxu0 0.0
    %212 = vmatpush.msra.mxu0 0.0
    %213 = vmatpush.msra.mxu0 0.0
    %214 = vmatpush.msra.mxu0 0.0
    %215 = vmatpush.msra.mxu0 0.0
    %216 = vmatpush.msra.mxu0 0.0
    %217 = vmatpush.msra.mxu0 0.0
    %218 = vmatpush.msra.mxu0 0.0
    %219 = vmatpush.msra.mxu0 %v202
    %220 = vmatpush.msra.mxu0 %v201
    %221 = vmatpush.msra.mxu0 %v200
    %222 = vmatpush.msra.mxu0 %v199
    %223 = vmatmul.f32.gmra.mxu0 %v138
    %v224 = vpop.f32.mrf.mxu0
    %v225 = vadd.f32 %v205, %v224
    %226 = vmatmul.f32.gmra.mxu0 %v141
    %v227 = vpop.f32.mrf.mxu0
    %v228 = vadd.f32 %v205, %v227
    %229 = vdwg.mxu0
    %v230 = vld [vmem:[#allocation5] sm:$0x1]
    %v231 = vld [vmem:[#allocation5 + $0x1] sm:$0x1]
    %vm232 = vcmp.gt.f32.partialorder %v230, 0.5
    %vm233 = vcmp.gt.f32.partialorder %v231, 0.5
    %vm234 = vcmask 64512
    %v236 = vsel %vm234, %v166, 0
    %v239 = vsel %vm234, %v194, 0
    %241 = vmatpush.xpose.msra.mxu0 0.0
    %242 = vmatpush.xpose.msra.mxu0 0.0
    %243 = vmatpush.xpose.msra.mxu0 0.0
    %244 = vmatpush.xpose.msra.mxu0 0.0
    %245 = vmatpush.xpose.msra.mxu0 0.0
    %246 = vmatpush.xpose.msra.mxu0 0.0
    %247 = vmatpush.xpose.msra.mxu0 0.0
    %248 = vmatpush.xpose.msra.mxu0 0.0
    %249 = vmatpush.xpose.msra.mxu0 0.0
    %250 = vmatpush.xpose.msra.mxu0 0.0
    %251 = vmatpush.xpose.msra.mxu0 0.0
    %252 = vmatpush.xpose.msra.mxu0 0.0
    %253 = vmatpush.xpose.msra.mxu0 0.0
    %254 = vmatpush.xpose.msra.mxu0 0.0
    %255 = vmatpush.xpose.msra.mxu0 0.0
    %256 = vmatpush.xpose.msra.mxu0 %v239
    %257 = vmatmul.f32.gmra.mxu0 %v236
    %v258 = vpop.f32.mrf.mxu0
    %v259 = vadd.f32 0.0, %v258
    %260 = vdwg.mxu0
    %v262 = vsel %vm234, %v167, 0
    %v265 = vsel %vm234, %v197, 0
    %267 = vmatpush.xpose.msra.mxu0 0.0
    %268 = vmatpush.xpose.msra.mxu0 0.0
    %269 = vmatpush.xpose.msra.mxu0 0.0
    %270 = vmatpush.xpose.msra.mxu0 0.0
    %271 = vmatpush.xpose.msra.mxu0 0.0
    %272 = vmatpush.xpose.msra.mxu0 0.0
    %273 = vmatpush.xpose.msra.mxu0 0.0
    %274 = vmatpush.xpose.msra.mxu0 0.0
    %275 = vmatpush.xpose.msra.mxu0 0.0
    %276 = vmatpush.xpose.msra.mxu0 0.0
    %277 = vmatpush.xpose.msra.mxu0 0.0
    %278 = vmatpush.xpose.msra.mxu0 0.0
    %279 = vmatpush.xpose.msra.mxu0 0.0
    %280 = vmatpush.xpose.msra.mxu0 0.0
    %281 = vmatpush.xpose.msra.mxu0 0.0
    %282 = vmatpush.xpose.msra.mxu0 %v265
    %283 = vmatmul.f32.gmra.mxu0 %v262
    %v284 = vpop.f32.mrf.mxu0
    %v285 = vadd.f32 0.0, %v284
    %286 = vdwg.mxu0
    %v287 = vsel %vm232, 1, 0
    %v288 = vsel %vm233, 1, 0
    %v289 = vperm.slane %v287, 0
    %v290 = vperm.slane %v288, 0
    %vm291 = vcmp.eq.s32.totalorder %v289, 1
    %vm292 = vcmp.eq.s32.totalorder %v290, 1
    %v293 = vsel %vm291, -1e+09, %v259
    %v294 = vsel %vm292, -1e+09, %v285
    %v295 = vsel %vm234, %v293, -inf
    %296 = vmax.xlane.f32.xlu0 %v295
    %v297 = vpop.xlane.xlu0 %296
    %v298 = vsel %vm234, %v294, -inf
    %299 = vmax.xlane.f32.xlu0 %v298
    %v300 = vpop.xlane.xlu0 %299
    %v301 = vsub.f32 %v293, %v297
    %v302 = vsub.f32 %v294, %v300
    %v303 = vmul.f32 %v301, 1.442695
    %v304 = vpow.pop %v303
    %v305 = vmul.f32 %v302, 1.442695
    %v306 = vpow.pop %v305
    %v307 = vsel %vm234, %v304, 0.0
    %308 = vadd.xlane.f32.xlu0 %v307
    %v309 = vpop.xlane.xlu0 %308
    %v310 = vsel %vm234, %v306, 0.0
    %311 = vadd.xlane.f32.xlu0 %v310
    %v312 = vpop.xlane.xlu0 %311
    %v313 = vrcp.pop %v309
    %v314 = vmul.f32 %v309, %v313
    %v315 = vsub.f32 1.0, %v314
    %v316 = vmul.f32 %v313, %v315
    %v317 = vadd.f32 %v313, %v316
    %vm318 = vweird.f32 %v309
    %vm319 = vweird.f32 %v313
    %vm320 = vmor %vm318, %vm319
    %v321 = vsel %vm320, %v313, %v317
    %v322 = vand.u32 2147483647, %v309
    %vm323 = vcmp.eq.f32.partialorder %v322, 8.507059e+37
    %v324 = vand.u32 %v309, 2147483648
    %v325 = vor.u32 1.1754944e-38, %v324
    %v326 = vsel %vm323, %v325, %v321
    %v327 = vmul.f32 %v304, %v326
    %v328 = vrcp.pop %v312
    %v329 = vmul.f32 %v312, %v328
    %v330 = vsub.f32 1.0, %v329
    %v331 = vmul.f32 %v328, %v330
    %v332 = vadd.f32 %v328, %v331
    %vm333 = vweird.f32 %v312
    %vm334 = vweird.f32 %v328
    %vm335 = vmor %vm333, %vm334
    %v336 = vsel %vm335, %v328, %v332
    %v337 = vand.u32 2147483647, %v312
    %vm338 = vcmp.eq.f32.partialorder %v337, 8.507059e+37
    %v339 = vand.u32 %v312, 2147483648
    %v340 = vor.u32 1.1754944e-38, %v339
    %v341 = vsel %vm338, %v340, %v336
    %v342 = vmul.f32 %v306, %v341
    %v344 = vsel %vm234, %v327, 0
    %346 = vmatpush.msra.mxu0 0.0
    %347 = vmatpush.msra.mxu0 0.0
    %348 = vmatpush.msra.mxu0 0.0
    %349 = vmatpush.msra.mxu0 0.0
    %350 = vmatpush.msra.mxu0 0.0
    %351 = vmatpush.msra.mxu0 0.0
    %352 = vmatpush.msra.mxu0 0.0
    %353 = vmatpush.msra.mxu0 0.0
    %354 = vmatpush.msra.mxu0 0.0
    %355 = vmatpush.msra.mxu0 0.0
    %356 = vmatpush.msra.mxu0 0.0
    %357 = vmatpush.msra.mxu0 0.0
    %358 = vmatpush.msra.mxu0 0.0
    %359 = vmatpush.msra.mxu0 0.0
    %360 = vmatpush.msra.mxu0 0.0
    %361 = vmatpush.msra.mxu0 %v225
    %362 = vmatmul.f32.gmra.mxu0 %v344
    %v363 = vpop.f32.mrf.mxu0
    %v364 = vadd.f32 0.0, %v363
    %365 = vdwg.mxu0
    %v367 = vsel %vm234, %v342, 0
    %369 = vmatpush.msra.mxu0 0.0
    %370 = vmatpush.msra.mxu0 0.0
    %371 = vmatpush.msra.mxu0 0.0
    %372 = vmatpush.msra.mxu0 0.0
    %373 = vmatpush.msra.mxu0 0.0
    %374 = vmatpush.msra.mxu0 0.0
    %375 = vmatpush.msra.mxu0 0.0
    %376 = vmatpush.msra.mxu0 0.0
    %377 = vmatpush.msra.mxu0 0.0
    %378 = vmatpush.msra.mxu0 0.0
    %379 = vmatpush.msra.mxu0 0.0
    %380 = vmatpush.msra.mxu0 0.0
    %381 = vmatpush.msra.mxu0 0.0
    %382 = vmatpush.msra.mxu0 0.0
    %383 = vmatpush.msra.mxu0 0.0
    %384 = vmatpush.msra.mxu0 %v228
    %385 = vmatmul.f32.gmra.mxu0 %v367
    %v386 = vpop.f32.mrf.mxu0
    %v387 = vadd.f32 0.0, %v386
    %388 = vdwg.mxu0
    %v389 = vld [vmem:[#allocation7] sm:$0xff]
    %390 = vrot.lane.b32.xlu0 %v166, 120
    %v391 = vpop.permute.xlu0 %390
    %392 = vrot.lane.b32.xlu0 %v194, 120
    %v393 = vpop.permute.xlu0 %392
    %v394 = vsel %vm234, %v391, 0
    %v396 = vsel %vm234, %v393, 0
    %398 = vmatpush.xpose.msra.mxu0 0.0
    %399 = vmatpush.xpose.msra.mxu0 0.0
    %400 = vmatpush.xpose.msra.mxu0 0.0
    %401 = vmatpush.xpose.msra.mxu0 0.0
    %402 = vmatpush.xpose.msra.mxu0 0.0
    %403 = vmatpush.xpose.msra.mxu0 0.0
    %404 = vmatpush.xpose.msra.mxu0 0.0
    %405 = vmatpush.xpose.msra.mxu0 0.0
    %406 = vmatpush.xpose.msra.mxu0 0.0
    %407 = vmatpush.xpose.msra.mxu0 0.0
    %408 = vmatpush.xpose.msra.mxu0 0.0
    %409 = vmatpush.xpose.msra.mxu0 0.0
    %410 = vmatpush.xpose.msra.mxu0 0.0
    %411 = vmatpush.xpose.msra.mxu0 0.0
    %412 = vmatpush.xpose.msra.mxu0 0.0
    %413 = vmatpush.xpose.msra.mxu0 %v396
    %414 = vmatmul.f32.gmra.mxu0 %v394
    %v415 = vpop.f32.mrf.mxu0
    %v416 = vadd.f32 0.0, %v415
    %417 = vdwg.mxu0
    %418 = vrot.lane.b32.xlu0 %v167, 120
    %v419 = vpop.permute.xlu0 %418
    %420 = vrot.lane.b32.xlu0 %v197, 120
    %v421 = vpop.permute.xlu0 %420
    %v422 = vsel %vm234, %v419, 0
    %v424 = vsel %vm234, %v421, 0
    %426 = vmatpush.xpose.msra.mxu0 0.0
    %427 = vmatpush.xpose.msra.mxu0 0.0
    %428 = vmatpush.xpose.msra.mxu0 0.0
    %429 = vmatpush.xpose.msra.mxu0 0.0
    %430 = vmatpush.xpose.msra.mxu0 0.0
    %431 = vmatpush.xpose.msra.mxu0 0.0
    %432 = vmatpush.xpose.msra.mxu0 0.0
    %433 = vmatpush.xpose.msra.mxu0 0.0
    %434 = vmatpush.xpose.msra.mxu0 0.0
    %435 = vmatpush.xpose.msra.mxu0 0.0
    %436 = vmatpush.xpose.msra.mxu0 0.0
    %437 = vmatpush.xpose.msra.mxu0 0.0
    %438 = vmatpush.xpose.msra.mxu0 0.0
    %439 = vmatpush.xpose.msra.mxu0 0.0
    %440 = vmatpush.xpose.msra.mxu0 0.0
    %441 = vmatpush.xpose.msra.mxu0 %v424
    %442 = vmatmul.f32.gmra.mxu0 %v422
    %v443 = vpop.f32.mrf.mxu0
    %v444 = vadd.f32 0.0, %v443
    %445 = vdwg.mxu0
    %v446 = vsel %vm291, -1e+09, %v416
    %v447 = vsel %vm292, -1e+09, %v444
    %v448 = vsel %vm234, %v446, -inf
    %449 = vmax.xlane.f32.xlu0 %v448
    %v450 = vpop.xlane.xlu0 %449
    %v451 = vsel %vm234, %v447, -inf
    %452 = vmax.xlane.f32.xlu0 %v451
    %v453 = vpop.xlane.xlu0 %452
    %v454 = vsub.f32 %v446, %v450
    %v455 = vsub.f32 %v447, %v453
    %v456 = vmul.f32 %v454, 1.442695
    %v457 = vpow.pop %v456
    %v458 = vmul.f32 %v455, 1.442695
    %v459 = vpow.pop %v458
    %v460 = vsel %vm234, %v457, 0.0
    %461 = vadd.xlane.f32.xlu0 %v460
    %v462 = vpop.xlane.xlu0 %461
    %v463 = vsel %vm234, %v459, 0.0
    %464 = vadd.xlane.f32.xlu0 %v463
    %v465 = vpop.xlane.xlu0 %464
    %v466 = vrcp.pop %v462
    %v467 = vmul.f32 %v462, %v466
    %v468 = vsub.f32 1.0, %v467
    %v469 = vmul.f32 %v466, %v468
    %v470 = vadd.f32 %v466, %v469
    %vm471 = vweird.f32 %v462
    %vm472 = vweird.f32 %v466
    %vm473 = vmor %vm471, %vm472
    %v474 = vsel %vm473, %v466, %v470
    %v475 = vand.u32 2147483647, %v462
    %vm476 = vcmp.eq.f32.partialorder %v475, 8.507059e+37
    %v477 = vand.u32 %v462, 2147483648
    %v478 = vor.u32 1.1754944e-38, %v477
    %v479 = vsel %vm476, %v478, %v474
    %v480 = vmul.f32 %v457, %v479
    %v481 = vrcp.pop %v465
    %v482 = vmul.f32 %v465, %v481
    %v483 = vsub.f32 1.0, %v482
    %v484 = vmul.f32 %v481, %v483
    %v485 = vadd.f32 %v481, %v484
    %vm486 = vweird.f32 %v465
    %vm487 = vweird.f32 %v481
    %vm488 = vmor %vm486, %vm487
    %v489 = vsel %vm488, %v481, %v485
    %v490 = vand.u32 2147483647, %v465
    %vm491 = vcmp.eq.f32.partialorder %v490, 8.507059e+37
    %v492 = vand.u32 %v465, 2147483648
    %v493 = vor.u32 1.1754944e-38, %v492
    %v494 = vsel %vm491, %v493, %v489
    %v495 = vmul.f32 %v459, %v494
    %497 = vrot.lane.b32.xlu0 %v225, 120
    %v498 = vpop.permute.xlu0 %497
    %v501 = vsel %vm234, %v480, 0
    %503 = vmatpush.msra.mxu0 0.0
    %504 = vmatpush.msra.mxu0 0.0
    %505 = vmatpush.msra.mxu0 0.0
    %506 = vmatpush.msra.mxu0 0.0
    %507 = vmatpush.msra.mxu0 0.0
    %508 = vmatpush.msra.mxu0 0.0
    %509 = vmatpush.msra.mxu0 0.0
    %510 = vmatpush.msra.mxu0 0.0
    %511 = vmatpush.msra.mxu0 0.0
    %512 = vmatpush.msra.mxu0 0.0
    %513 = vmatpush.msra.mxu0 0.0
    %514 = vmatpush.msra.mxu0 0.0
    %515 = vmatpush.msra.mxu0 0.0
    %516 = vmatpush.msra.mxu0 0.0
    %517 = vmatpush.msra.mxu0 0.0
    %518 = vmatpush.msra.mxu0 %v498
    %519 = vmatmul.f32.gmra.mxu0 %v501
    %v520 = vpop.f32.mrf.mxu0
    %v521 = vadd.f32 0.0, %v520
    %522 = vdwg.mxu0
    %524 = vrot.lane.b32.xlu0 %v228, 120
    %v525 = vpop.permute.xlu0 %524
    %v528 = vsel %vm234, %v495, 0
    %530 = vmatpush.msra.mxu0 0.0
    %531 = vmatpush.msra.mxu0 0.0
    %532 = vmatpush.msra.mxu0 0.0
    %533 = vmatpush.msra.mxu0 0.0
    %534 = vmatpush.msra.mxu0 0.0
    %535 = vmatpush.msra.mxu0 0.0
    %536 = vmatpush.msra.mxu0 0.0
    %537 = vmatpush.msra.mxu0 0.0
    %538 = vmatpush.msra.mxu0 0.0
    %539 = vmatpush.msra.mxu0 0.0
    %540 = vmatpush.msra.mxu0 0.0
    %541 = vmatpush.msra.mxu0 0.0
    %542 = vmatpush.msra.mxu0 0.0
    %543 = vmatpush.msra.mxu0 0.0
    %544 = vmatpush.msra.mxu0 0.0
    %545 = vmatpush.msra.mxu0 %v525
    %546 = vmatmul.f32.gmra.mxu0 %v528
    %v547 = vpop.f32.mrf.mxu0
    %v548 = vadd.f32 0.0, %v547
    %549 = vdwg.mxu0
    %v550 = vld [vmem:[#allocation7 + $0x8] sm:$0xff]
    %v552 = vsel %vm234, %v521, 0
    %v555 = vsel %vm234, %v548, 0
    %557 = vmatpush.msra.mxu0 0.0
    %558 = vmatpush.msra.mxu0 0.0
    %559 = vmatpush.msra.mxu0 0.0
    %560 = vmatpush.msra.mxu0 0.0
    %561 = vmatpush.msra.mxu0 0.0
    %562 = vmatpush.msra.mxu0 0.0
    %563 = vmatpush.msra.mxu0 0.0
    %564 = vmatpush.msra.mxu0 0.0
    %565 = vmatpush.msra.mxu0 0.0
    %566 = vmatpush.msra.mxu0 0.0
    %567 = vmatpush.msra.mxu0 0.0
    %568 = vmatpush.msra.mxu0 0.0
    %569 = vmatpush.msra.mxu0 0.0
    %570 = vmatpush.msra.mxu0 0.0
    %571 = vmatpush.msra.mxu0 0.0
    %572 = vmatpush.msra.mxu0 %v550
    %573 = vmatmul.f32.gmra.mxu0 %v552
    %v574 = vpop.f32.mrf.mxu0
    %v575 = vadd.f32 0.0, %v574
    %576 = vmatmul.f32.gmra.mxu0 %v555
    %v577 = vpop.f32.mrf.mxu0
    %v578 = vadd.f32 0.0, %v577
    %579 = vdwg.mxu0
    %580 = vrot.lane.b32.xlu0 %v166, 112
    %v581 = vpop.permute.xlu0 %580
    %582 = vrot.lane.b32.xlu0 %v194, 112
    %v583 = vpop.permute.xlu0 %582
    %v584 = vsel %vm234, %v581, 0
    %v586 = vsel %vm234, %v583, 0
    %588 = vmatpush.xpose.msra.mxu0 0.0
    %589 = vmatpush.xpose.msra.mxu0 0.0
    %590 = vmatpush.xpose.msra.mxu0 0.0
    %591 = vmatpush.xpose.msra.mxu0 0.0
    %592 = vmatpush.xpose.msra.mxu0 0.0
    %593 = vmatpush.xpose.msra.mxu0 0.0
    %594 = vmatpush.xpose.msra.mxu0 0.0
    %595 = vmatpush.xpose.msra.mxu0 0.0
    %596 = vmatpush.xpose.msra.mxu0 0.0
    %597 = vmatpush.xpose.msra.mxu0 0.0
    %598 = vmatpush.xpose.msra.mxu0 0.0
    %599 = vmatpush.xpose.msra.mxu0 0.0
    %600 = vmatpush.xpose.msra.mxu0 0.0
    %601 = vmatpush.xpose.msra.mxu0 0.0
    %602 = vmatpush.xpose.msra.mxu0 0.0
    %603 = vmatpush.xpose.msra.mxu0 %v586
    %604 = vmatmul.f32.gmra.mxu0 %v584
    %v605 = vpop.f32.mrf.mxu0
    %v606 = vadd.f32 0.0, %v605
    %607 = vdwg.mxu0
    %608 = vrot.lane.b32.xlu0 %v167, 112
    %v609 = vpop.permute.xlu0 %608
    %610 = vrot.lane.b32.xlu0 %v197, 112
    %v611 = vpop.permute.xlu0 %610
    %v612 = vsel %vm234, %v609, 0
    %v614 = vsel %vm234, %v611, 0
    %616 = vmatpush.xpose.msra.mxu0 0.0
    %617 = vmatpush.xpose.msra.mxu0 0.0
    %618 = vmatpush.xpose.msra.mxu0 0.0
    %619 = vmatpush.xpose.msra.mxu0 0.0
    %620 = vmatpush.xpose.msra.mxu0 0.0
    %621 = vmatpush.xpose.msra.mxu0 0.0
    %622 = vmatpush.xpose.msra.mxu0 0.0
    %623 = vmatpush.xpose.msra.mxu0 0.0
    %624 = vmatpush.xpose.msra.mxu0 0.0
    %625 = vmatpush.xpose.msra.mxu0 0.0
    %626 = vmatpush.xpose.msra.mxu0 0.0
    %627 = vmatpush.xpose.msra.mxu0 0.0
    %628 = vmatpush.xpose.msra.mxu0 0.0
    %629 = vmatpush.xpose.msra.mxu0 0.0
    %630 = vmatpush.xpose.msra.mxu0 0.0
    %631 = vmatpush.xpose.msra.mxu0 %v614
    %632 = vmatmul.f32.gmra.mxu0 %v612
    %v633 = vpop.f32.mrf.mxu0
    %v634 = vadd.f32 0.0, %v633
    %635 = vdwg.mxu0
    %v636 = vsel %vm291, -1e+09, %v606
    %v637 = vsel %vm292, -1e+09, %v634
    %v638 = vsel %vm234, %v636, -inf
    %639 = vmax.xlane.f32.xlu0 %v638
    %v640 = vpop.xlane.xlu0 %639
    %v641 = vsel %vm234, %v637, -inf
    %642 = vmax.xlane.f32.xlu0 %v641
    %v643 = vpop.xlane.xlu0 %642
    %v644 = vsub.f32 %v636, %v640
    %v645 = vsub.f32 %v637, %v643
    %v646 = vmul.f32 %v644, 1.442695
    %v647 = vpow.pop %v646
    %v648 = vmul.f32 %v645, 1.442695
    %v649 = vpow.pop %v648
    %v650 = vsel %vm234, %v647, 0.0
    %651 = vadd.xlane.f32.xlu0 %v650
    %v652 = vpop.xlane.xlu0 %651
    %v653 = vsel %vm234, %v649, 0.0
    %654 = vadd.xlane.f32.xlu0 %v653
    %v655 = vpop.xlane.xlu0 %654
    %v656 = vrcp.pop %v652
    %v657 = vmul.f32 %v652, %v656
    %v658 = vsub.f32 1.0, %v657
    %v659 = vmul.f32 %v656, %v658
    %v660 = vadd.f32 %v656, %v659
    %vm661 = vweird.f32 %v652
    %vm662 = vweird.f32 %v656
    %vm663 = vmor %vm661, %vm662
    %v664 = vsel %vm663, %v656, %v660
    %v665 = vand.u32 2147483647, %v652
    %vm666 = vcmp.eq.f32.partialorder %v665, 8.507059e+37
    %v667 = vand.u32 %v652, 2147483648
    %v668 = vor.u32 1.1754944e-38, %v667
    %v669 = vsel %vm666, %v668, %v664
    %v670 = vmul.f32 %v647, %v669
    %v671 = vrcp.pop %v655
    %v672 = vmul.f32 %v655, %v671
    %v673 = vsub.f32 1.0, %v672
    %v674 = vmul.f32 %v671, %v673
    %v675 = vadd.f32 %v671, %v674
    %vm676 = vweird.f32 %v655
    %vm677 = vweird.f32 %v671
    %vm678 = vmor %vm676, %vm677
    %v679 = vsel %vm678, %v671, %v675
    %v680 = vand.u32 2147483647, %v655
    %vm681 = vcmp.eq.f32.partialorder %v680, 8.507059e+37
    %v682 = vand.u32 %v655, 2147483648
    %v683 = vor.u32 1.1754944e-38, %v682
    %v684 = vsel %vm681, %v683, %v679
    %v685 = vmul.f32 %v649, %v684
    %686 = vrot.lane.b32.xlu0 %v225, 112
    %v687 = vpop.permute.xlu0 %686
    %v690 = vsel %vm234, %v670, 0
    %692 = vmatpush.msra.mxu0 0.0
    %693 = vmatpush.msra.mxu0 0.0
    %694 = vmatpush.msra.mxu0 0.0
    %695 = vmatpush.msra.mxu0 0.0
    %696 = vmatpush.msra.mxu0 0.0
    %697 = vmatpush.msra.mxu0 0.0
    %698 = vmatpush.msra.mxu0 0.0
    %699 = vmatpush.msra.mxu0 0.0
    %700 = vmatpush.msra.mxu0 0.0
    %701 = vmatpush.msra.mxu0 0.0
    %702 = vmatpush.msra.mxu0 0.0
    %703 = vmatpush.msra.mxu0 0.0
    %704 = vmatpush.msra.mxu0 0.0
    %705 = vmatpush.msra.mxu0 0.0
    %706 = vmatpush.msra.mxu0 0.0
    %707 = vmatpush.msra.mxu0 %v687
    %708 = vmatmul.f32.gmra.mxu0 %v690
    %v709 = vpop.f32.mrf.mxu0
    %v710 = vadd.f32 0.0, %v709
    %711 = vdwg.mxu0
    %712 = vrot.lane.b32.xlu0 %v228, 112
    %v713 = vpop.permute.xlu0 %712
    %v716 = vsel %vm234, %v685, 0
    %718 = vmatpush.msra.mxu0 0.0
    %719 = vmatpush.msra.mxu0 0.0
    %720 = vmatpush.msra.mxu0 0.0
    %721 = vmatpush.msra.mxu0 0.0
    %722 = vmatpush.msra.mxu0 0.0
    %723 = vmatpush.msra.mxu0 0.0
    %724 = vmatpush.msra.mxu0 0.0
    %725 = vmatpush.msra.mxu0 0.0
    %726 = vmatpush.msra.mxu0 0.0
    %727 = vmatpush.msra.mxu0 0.0
    %728 = vmatpush.msra.mxu0 0.0
    %729 = vmatpush.msra.mxu0 0.0
    %730 = vmatpush.msra.mxu0 0.0
    %731 = vmatpush.msra.mxu0 0.0
    %732 = vmatpush.msra.mxu0 0.0
    %733 = vmatpush.msra.mxu0 %v713
    %734 = vmatmul.f32.gmra.mxu0 %v716
    %v735 = vpop.f32.mrf.mxu0
    %v736 = vadd.f32 0.0, %v735
    %737 = vdwg.mxu0
    %v738 = vld [vmem:[#allocation7 + $0x10] sm:$0xff]
    %v740 = vsel %vm234, %v710, 0
    %v743 = vsel %vm234, %v736, 0
    %745 = vmatpush.msra.mxu0 0.0
    %746 = vmatpush.msra.mxu0 0.0
    %747 = vmatpush.msra.mxu0 0.0
    %748 = vmatpush.msra.mxu0 0.0
    %749 = vmatpush.msra.mxu0 0.0
    %750 = vmatpush.msra.mxu0 0.0
    %751 = vmatpush.msra.mxu0 0.0
    %752 = vmatpush.msra.mxu0 0.0
    %753 = vmatpush.msra.mxu0 0.0
    %754 = vmatpush.msra.mxu0 0.0
    %755 = vmatpush.msra.mxu0 0.0
    %756 = vmatpush.msra.mxu0 0.0
    %757 = vmatpush.msra.mxu0 0.0
    %758 = vmatpush.msra.mxu0 0.0
    %759 = vmatpush.msra.mxu0 0.0
    %760 = vmatpush.msra.mxu0 %v738
    %761 = vmatmul.f32.gmra.mxu0 %v740
    %v762 = vpop.f32.mrf.mxu0
    %v763 = vadd.f32 0.0, %v762
    %764 = vmatmul.f32.gmra.mxu0 %v743
    %v765 = vpop.f32.mrf.mxu0
    %v766 = vadd.f32 0.0, %v765
    %767 = vdwg.mxu0
    %768 = vrot.lane.b32.xlu0 %v166, 104
    %v769 = vpop.permute.xlu0 %768
    %770 = vrot.lane.b32.xlu0 %v194, 104
    %v771 = vpop.permute.xlu0 %770
    %v772 = vsel %vm234, %v769, 0
    %v774 = vsel %vm234, %v771, 0
    %776 = vmatpush.xpose.msra.mxu0 0.0
    %777 = vmatpush.xpose.msra.mxu0 0.0
    %778 = vmatpush.xpose.msra.mxu0 0.0
    %779 = vmatpush.xpose.msra.mxu0 0.0
    %780 = vmatpush.xpose.msra.mxu0 0.0
    %781 = vmatpush.xpose.msra.mxu0 0.0
    %782 = vmatpush.xpose.msra.mxu0 0.0
    %783 = vmatpush.xpose.msra.mxu0 0.0
    %784 = vmatpush.xpose.msra.mxu0 0.0
    %785 = vmatpush.xpose.msra.mxu0 0.0
    %786 = vmatpush.xpose.msra.mxu0 0.0
    %787 = vmatpush.xpose.msra.mxu0 0.0
    %788 = vmatpush.xpose.msra.mxu0 0.0
    %789 = vmatpush.xpose.msra.mxu0 0.0
    %790 = vmatpush.xpose.msra.mxu0 0.0
    %791 = vmatpush.xpose.msra.mxu0 %v774
    %792 = vmatmul.f32.gmra.mxu0 %v772
    %v793 = vpop.f32.mrf.mxu0
    %v794 = vadd.f32 0.0, %v793
    %795 = vdwg.mxu0
    %796 = vrot.lane.b32.xlu0 %v167, 104
    %v797 = vpop.permute.xlu0 %796
    %798 = vrot.lane.b32.xlu0 %v197, 104
    %v799 = vpop.permute.xlu0 %798
    %v800 = vsel %vm234, %v797, 0
    %v802 = vsel %vm234, %v799, 0
    %804 = vmatpush.xpose.msra.mxu0 0.0
    %805 = vmatpush.xpose.msra.mxu0 0.0
    %806 = vmatpush.xpose.msra.mxu0 0.0
    %807 = vmatpush.xpose.msra.mxu0 0.0
    %808 = vmatpush.xpose.msra.mxu0 0.0
    %809 = vmatpush.xpose.msra.mxu0 0.0
    %810 = vmatpush.xpose.msra.mxu0 0.0
    %811 = vmatpush.xpose.msra.mxu0 0.0
    %812 = vmatpush.xpose.msra.mxu0 0.0
    %813 = vmatpush.xpose.msra.mxu0 0.0
    %814 = vmatpush.xpose.msra.mxu0 0.0
    %815 = vmatpush.xpose.msra.mxu0 0.0
    %816 = vmatpush.xpose.msra.mxu0 0.0
    %817 = vmatpush.xpose.msra.mxu0 0.0
    %818 = vmatpush.xpose.msra.mxu0 0.0
    %819 = vmatpush.xpose.msra.mxu0 %v802
    %820 = vmatmul.f32.gmra.mxu0 %v800
    %v821 = vpop.f32.mrf.mxu0
    %v822 = vadd.f32 0.0, %v821
    %823 = vdwg.mxu0
    %v824 = vsel %vm291, -1e+09, %v794
    %v825 = vsel %vm292, -1e+09, %v822
    %v826 = vsel %vm234, %v824, -inf
    %827 = vmax.xlane.f32.xlu0 %v826
    %v828 = vpop.xlane.xlu0 %827
    %v829 = vsel %vm234, %v825, -inf
    %830 = vmax.xlane.f32.xlu0 %v829
    %v831 = vpop.xlane.xlu0 %830
    %v832 = vsub.f32 %v824, %v828
    %v833 = vsub.f32 %v825, %v831
    %v834 = vmul.f32 %v832, 1.442695
    %v835 = vpow.pop %v834
    %v836 = vmul.f32 %v833, 1.442695
    %v837 = vpow.pop %v836
    %v838 = vsel %vm234, %v835, 0.0
    %839 = vadd.xlane.f32.xlu0 %v838
    %v840 = vpop.xlane.xlu0 %839
    %v841 = vsel %vm234, %v837, 0.0
    %842 = vadd.xlane.f32.xlu0 %v841
    %v843 = vpop.xlane.xlu0 %842
    %v844 = vrcp.pop %v840
    %v845 = vmul.f32 %v840, %v844
    %v846 = vsub.f32 1.0, %v845
    %v847 = vmul.f32 %v844, %v846
    %v848 = vadd.f32 %v844, %v847
    %vm849 = vweird.f32 %v840
    %vm850 = vweird.f32 %v844
    %vm851 = vmor %vm849, %vm850
    %v852 = vsel %vm851, %v844, %v848
    %v853 = vand.u32 2147483647, %v840
    %vm854 = vcmp.eq.f32.partialorder %v853, 8.507059e+37
    %v855 = vand.u32 %v840, 2147483648
    %v856 = vor.u32 1.1754944e-38, %v855
    %v857 = vsel %vm854, %v856, %v852
    %v858 = vmul.f32 %v835, %v857
    %v859 = vrcp.pop %v843
    %v860 = vmul.f32 %v843, %v859
    %v861 = vsub.f32 1.0, %v860
    %v862 = vmul.f32 %v859, %v861
    %v863 = vadd.f32 %v859, %v862
    %vm864 = vweird.f32 %v843
    %vm865 = vweird.f32 %v859
    %vm866 = vmor %vm864, %vm865
    %v867 = vsel %vm866, %v859, %v863
    %v868 = vand.u32 2147483647, %v843
    %vm869 = vcmp.eq.f32.partialorder %v868, 8.507059e+37
    %v870 = vand.u32 %v843, 2147483648
    %v871 = vor.u32 1.1754944e-38, %v870
    %v872 = vsel %vm869, %v871, %v867
    %v873 = vmul.f32 %v837, %v872
    %874 = vrot.lane.b32.xlu0 %v225, 104
    %v875 = vpop.permute.xlu0 %874
    %v878 = vsel %vm234, %v858, 0
    %880 = vmatpush.msra.mxu0 0.0
    %881 = vmatpush.msra.mxu0 0.0
    %882 = vmatpush.msra.mxu0 0.0
    %883 = vmatpush.msra.mxu0 0.0
    %884 = vmatpush.msra.mxu0 0.0
    %885 = vmatpush.msra.mxu0 0.0
    %886 = vmatpush.msra.mxu0 0.0
    %887 = vmatpush.msra.mxu0 0.0
    %888 = vmatpush.msra.mxu0 0.0
    %889 = vmatpush.msra.mxu0 0.0
    %890 = vmatpush.msra.mxu0 0.0
    %891 = vmatpush.msra.mxu0 0.0
    %892 = vmatpush.msra.mxu0 0.0
    %893 = vmatpush.msra.mxu0 0.0
    %894 = vmatpush.msra.mxu0 0.0
    %895 = vmatpush.msra.mxu0 %v875
    %896 = vmatmul.f32.gmra.mxu0 %v878
    %v897 = vpop.f32.mrf.mxu0
    %v898 = vadd.f32 0.0, %v897
    %899 = vdwg.mxu0
    %900 = vrot.lane.b32.xlu0 %v228, 104
    %v901 = vpop.permute.xlu0 %900
    %v904 = vsel %vm234, %v873, 0
    %906 = vmatpush.msra.mxu0 0.0
    %907 = vmatpush.msra.mxu0 0.0
    %908 = vmatpush.msra.mxu0 0.0
    %909 = vmatpush.msra.mxu0 0.0
    %910 = vmatpush.msra.mxu0 0.0
    %911 = vmatpush.msra.mxu0 0.0
    %912 = vmatpush.msra.mxu0 0.0
    %913 = vmatpush.msra.mxu0 0.0
    %914 = vmatpush.msra.mxu0 0.0
    %915 = vmatpush.msra.mxu0 0.0
    %916 = vmatpush.msra.mxu0 0.0
    %917 = vmatpush.msra.mxu0 0.0
    %918 = vmatpush.msra.mxu0 0.0
    %919 = vmatpush.msra.mxu0 0.0
    %920 = vmatpush.msra.mxu0 0.0
    %921 = vmatpush.msra.mxu0 %v901
    %922 = vmatmul.f32.gmra.mxu0 %v904
    %v923 = vpop.f32.mrf.mxu0
    %v924 = vadd.f32 0.0, %v923
    %925 = vdwg.mxu0
    %v926 = vld [vmem:[#allocation7 + $0x18] sm:$0xff]
    %v928 = vsel %vm234, %v898, 0
    %v931 = vsel %vm234, %v924, 0
    %933 = vmatpush.msra.mxu0 0.0
    %934 = vmatpush.msra.mxu0 0.0
    %935 = vmatpush.msra.mxu0 0.0
    %936 = vmatpush.msra.mxu0 0.0
    %937 = vmatpush.msra.mxu0 0.0
    %938 = vmatpush.msra.mxu0 0.0
    %939 = vmatpush.msra.mxu0 0.0
    %940 = vmatpush.msra.mxu0 0.0
    %941 = vmatpush.msra.mxu0 0.0
    %942 = vmatpush.msra.mxu0 0.0
    %943 = vmatpush.msra.mxu0 0.0
    %944 = vmatpush.msra.mxu0 0.0
    %945 = vmatpush.msra.mxu0 0.0
    %946 = vmatpush.msra.mxu0 0.0
    %947 = vmatpush.msra.mxu0 0.0
    %948 = vmatpush.msra.mxu0 %v926
    %949 = vmatmul.f32.gmra.mxu0 %v928
    %v950 = vpop.f32.mrf.mxu0
    %v951 = vadd.f32 0.0, %v950
    %952 = vmatmul.f32.gmra.mxu0 %v931
    %v953 = vpop.f32.mrf.mxu0
    %v954 = vadd.f32 0.0, %v953
    %955 = vdwg.mxu0
    %956 = vst.msk [vmem:[#allocation11] sm:$0xff] %vm234, %v327
    %957 = vst.msk [vmem:[#allocation11 + $0x8] sm:$0xff] %vm234, %v480
    %958 = vst.msk [vmem:[#allocation11 + $0x10] sm:$0xff] %vm234, %v670
    %959 = vst.msk [vmem:[#allocation11 + $0x18] sm:$0xff] %vm234, %v858
    %960 = vst.msk [vmem:[#allocation11 + $0x20] sm:$0xff] %vm234, %v342
    %961 = vst.msk [vmem:[#allocation11 + $0x28] sm:$0xff] %vm234, %v495
    %962 = vst.msk [vmem:[#allocation11 + $0x30] sm:$0xff] %vm234, %v685
    %963 = vst.msk [vmem:[#allocation11 + $0x38] sm:$0xff] %vm234, %v873
    %v965 = vsel %vm234, %v364, 0
    %v968 = vsel %vm234, %v387, 0
    %970 = vmatpush.msra.mxu0 0.0
    %971 = vmatpush.msra.mxu0 0.0
    %972 = vmatpush.msra.mxu0 0.0
    %973 = vmatpush.msra.mxu0 0.0
    %974 = vmatpush.msra.mxu0 0.0
    %975 = vmatpush.msra.mxu0 0.0
    %976 = vmatpush.msra.mxu0 0.0
    %977 = vmatpush.msra.mxu0 0.0
    %978 = vmatpush.msra.mxu0 0.0
    %979 = vmatpush.msra.mxu0 0.0
    %980 = vmatpush.msra.mxu0 0.0
    %981 = vmatpush.msra.mxu0 0.0
    %982 = vmatpush.msra.mxu0 0.0
    %983 = vmatpush.msra.mxu0 0.0
    %984 = vmatpush.msra.mxu0 0.0
    %985 = vmatpush.msra.mxu0 %v389
    %986 = vmatmul.f32.gmra.mxu0 %v965
    %v987 = vpop.f32.mrf.mxu0
    %v988 = vadd.f32 %v575, %v987
    %989 = vmatmul.f32.gmra.mxu0 %v968
    %v990 = vpop.f32.mrf.mxu0
    %v991 = vadd.f32 %v578, %v990
    %992 = vdwg.mxu0
    %v993 = vadd.f32 %v988, %v763
    %v994 = vadd.f32 %v991, %v766
    %v995 = vadd.f32 %v993, %v951
    %v996 = vadd.f32 %v994, %v954
    %v997 = vld [vmem:[%s9] sm:$0x1]
    %v999 = vperm.slane %v997, 0
    %v1001 = vadd.f32 %v995, %v999
    %v1002 = vadd.f32 %v996, %v999
    %v1003 = vadd.f32 %v1001, %v126
    %v1004 = vadd.f32 %v1002, %v127
    %v1005 = vld [vmem:[%s10] sm:$0x1]
    %v1006 = vld [vmem:[%s11] sm:$0x1]
    %v1007 = vsel %vm136, %v1003, 0.0
    %1008 = vadd.xlane.f32.xlu0 %v1007
    %v1009 = vpop.xlane.xlu0 %1008
    %v1010 = vsel %vm136, %v1004, 0.0
    %1011 = vadd.xlane.f32.xlu0 %v1010
    %v1012 = vpop.xlane.xlu0 %1011
    %v1013 = vrcp.pop 32.0
    %v1014 = vmul.f32 32.0, %v1013
    %v1015 = vsub.f32 1.0, %v1014
    %v1016 = vmul.f32 %v1013, %v1015
    %v1017 = vadd.f32 %v1013, %v1016
    %vm1018 = vweird.f32 %v1013
    %v1019 = vsel %vm1018, %v1013, %v1017
    %v1020 = vmul.f32 %v1009, %v1019
    %v1021 = vmul.f32 %v1012, %v1019
    %v1022 = vsub.f32 %v1003, %v1020
    %v1023 = vsub.f32 %v1004, %v1021
    %v1024 = vmul.f32 %v1022, %v1022
    %v1025 = vmul.f32 %v1023, %v1023
    %v1026 = vsel %vm136, %v1024, 0.0
    %1027 = vadd.xlane.f32.xlu0 %v1026
    %v1028 = vpop.xlane.xlu0 %1027
    %v1029 = vsel %vm136, %v1025, 0.0
    %1030 = vadd.xlane.f32.xlu0 %v1029
    %v1031 = vpop.xlane.xlu0 %1030
    %v1032 = vmul.f32 %v1028, %v1019
    %v1033 = vmul.f32 %v1031, %v1019
    %v1034 = vadd.f32 %v1032, 1e-05
    %v1035 = vadd.f32 %v1033, 1e-05
    %v1036 = vrsqrt.pop %v1034
    %v1037 = vmul.f32 %v1036, %v1034
    %v1038 = vmul.f32 %v1037, %v1036
    %v1039 = vmul.f32 0.5, %v1038
    %v1040 = vsub.f32 1.5, %v1039
    %v1041 = vmul.f32 %v1036, %v1040
    %vm1042 = vweird.f32 %v1034
    %vm1043 = vweird.f32 %v1036
    %vm1044 = vmor %vm1042, %vm1043
    %v1045 = vsel %vm1044, %v1036, %v1041
    %v1046 = vrsqrt.pop %v1035
    %v1047 = vmul.f32 %v1046, %v1035
    %v1048 = vmul.f32 %v1047, %v1046
    %v1049 = vmul.f32 0.5, %v1048
    %v1050 = vsub.f32 1.5, %v1049
    %v1051 = vmul.f32 %v1046, %v1050
    %vm1052 = vweird.f32 %v1035
    %vm1053 = vweird.f32 %v1046
    %vm1054 = vmor %vm1052, %vm1053
    %v1055 = vsel %vm1054, %v1046, %v1051
    %v1056 = vmul.f32 %v1022, %v1045
    %v1057 = vmul.f32 %v1023, %v1055
    %v1059 = vperm.slane %v1005, 0
    %v1061 = vmul.f32 %v1056, %v1059
    %v1062 = vmul.f32 %v1057, %v1059
    %v1064 = vperm.slane %v1006, 0
    %v1066 = vadd.f32 %v1061, %v1064
    %v1067 = vadd.f32 %v1062, %v1064
    %v1068 = vld [vmem:[#allocation8] sm:$0xff]
    %v1069 = vld [vmem:[#allocation8 + $0x8] sm:$0xff]
    %v1070 = vld [vmem:[#allocation8 + $0x10] sm:$0xff]
    %v1071 = vld [vmem:[#allocation8 + $0x18] sm:$0xff]
    %v1072 = vld [vmem:[%s13] sm:$0x1]
    %v1074 = vperm.slane %v1072, 0
    %v1077 = vsel %vm136, %v1066, 0
    %v1080 = vsel %vm136, %v1067, 0
    %1082 = vmatpush.msra.mxu0 0.0
    %1083 = vmatpush.msra.mxu0 0.0
    %1084 = vmatpush.msra.mxu0 0.0
    %1085 = vmatpush.msra.mxu0 0.0
    %1086 = vmatpush.msra.mxu0 0.0
    %1087 = vmatpush.msra.mxu0 0.0
    %1088 = vmatpush.msra.mxu0 0.0
    %1089 = vmatpush.msra.mxu0 0.0
    %1090 = vmatpush.msra.mxu0 0.0
    %1091 = vmatpush.msra.mxu0 0.0
    %1092 = vmatpush.msra.mxu0 0.0
    %1093 = vmatpush.msra.mxu0 0.0
    %1094 = vmatpush.msra.mxu0 %v1071
    %1095 = vmatpush.msra.mxu0 %v1070
    %1096 = vmatpush.msra.mxu0 %v1069
    %1097 = vmatpush.msra.mxu0 %v1068
    %1098 = vmatmul.f32.gmra.mxu0 %v1077
    %v1099 = vpop.f32.mrf.mxu0
    %v1100 = vadd.f32 %v1074, %v1099
    %1101 = vmatmul.f32.gmra.mxu0 %v1080
    %v1102 = vpop.f32.mrf.mxu0
    %v1103 = vadd.f32 %v1074, %v1102
    %1104 = vdwg.mxu0
    %v1105 = vmul.f32 %v1100, 0.5
    %v1106 = vmul.f32 %v1103, 0.5
    %v1107 = vmul.f32 %v1100, 0.70710677
    %v1108 = vmul.f32 %v1103, 0.70710677
    %v1109 = vmax.f32 %v1107, -4.0
    %v1110 = vmax.f32 %v1108, -4.0
    %v1111 = vmin.f32 %v1109, 4.0
    %v1112 = vmin.f32 %v1110, 4.0
    %v1113 = vmul.f32 %v1111, %v1111
    %v1114 = vmul.f32 %v1112, %v1112
    %v1115 = vmul.f32 %v1113, -2.7261424e-10
    %v1116 = vmul.f32 %v1114, -2.7261424e-10
    %v1117 = vadd.f32 %v1115, 2.7706815e-08
    %v1118 = vadd.f32 %v1116, 2.7706815e-08
    %v1119 = vmul.f32 %v1117, %v1113
    %v1120 = vmul.f32 %v1118, %v1114
    %v1121 = vadd.f32 %v1119, -2.101024e-06
    %v1122 = vadd.f32 %v1120, -2.101024e-06
    %v1123 = vmul.f32 %v1121, %v1113
    %v1124 = vmul.f32 %v1122, %v1114
    %v1125 = vadd.f32 %v1123, -5.6925062e-05
    %v1126 = vadd.f32 %v1124, -5.6925062e-05
    %v1127 = vmul.f32 %v1125, %v1113
    %v1128 = vmul.f32 %v1126, %v1114
    %v1129 = vadd.f32 %v1127, -0.00073499064
    %v1130 = vadd.f32 %v1128, -0.00073499064
    %v1131 = vmul.f32 %v1129, %v1113
    %v1132 = vmul.f32 %v1130, %v1114
    %v1133 = vadd.f32 %v1131, -0.0029546
    %v1134 = vadd.f32 %v1132, -0.0029546
    %v1135 = vmul.f32 %v1133, %v1113
    %v1136 = vmul.f32 %v1134, %v1114
    %v1137 = vadd.f32 %v1135, -0.016096033
    %v1138 = vadd.f32 %v1136, -0.016096033
    %v1139 = vmul.f32 %v1137, %v1111
    %v1140 = vmul.f32 %v1138, %v1112
    %v1141 = vmul.f32 %v1113, -1.45660715e-05
    %v1142 = vmul.f32 %v1114, -1.45660715e-05
    %v1143 = vadd.f32 %v1141, -0.00021337405
    %v1144 = vadd.f32 %v1142, -0.00021337405
    %v1145 = vmul.f32 %v1143, %v1113
    %v1146 = vmul.f32 %v1144, %v1114
    %v1147 = vadd.f32 %v1145, -0.001682827
    %v1148 = vadd.f32 %v1146, -0.001682827
    %v1149 = vmul.f32 %v1147, %v1113
    %v1150 = vmul.f32 %v1148, %v1114
    %v1151 = vadd.f32 %v1149, -0.0073733293
    %v1152 = vadd.f32 %v1150, -0.0073733293
    %v1153 = vmul.f32 %v1151, %v1113
    %v1154 = vmul.f32 %v1152, %v1114
    %v1155 = vadd.f32 %v1153, -0.014264739
    %v1156 = vadd.f32 %v1154, -0.014264739
    %v1157 = vrcp.pop %v1155
    %v1158 = vmul.f32 %v1155, %v1157
    %v1159 = vsub.f32 1.0, %v1158
    %v1160 = vmul.f32 %v1157, %v1159
    %v1161 = vadd.f32 %v1157, %v1160
    %vm1162 = vweird.f32 %v1155
    %vm1163 = vweird.f32 %v1157
    %vm1164 = vmor %vm1162, %vm1163
    %v1165 = vsel %vm1164, %v1157, %v1161
    %v1166 = vand.u32 2147483647, %v1155
    %vm1167 = vcmp.eq.f32.partialorder %v1166, 8.507059e+37
    %v1168 = vand.u32 %v1155, 2147483648
    %v1169 = vor.u32 1.1754944e-38, %v1168
    %v1170 = vsel %vm1167, %v1169, %v1165
    %v1171 = vmul.f32 %v1139, %v1170
    %v1172 = vrcp.pop %v1156
    %v1173 = vmul.f32 %v1156, %v1172
    %v1174 = vsub.f32 1.0, %v1173
    %v1175 = vmul.f32 %v1172, %v1174
    %v1176 = vadd.f32 %v1172, %v1175
    %vm1177 = vweird.f32 %v1156
    %vm1178 = vweird.f32 %v1172
    %vm1179 = vmor %vm1177, %vm1178
    %v1180 = vsel %vm1179, %v1172, %v1176
    %v1181 = vand.u32 2147483647, %v1156
    %vm1182 = vcmp.eq.f32.partialorder %v1181, 8.507059e+37
    %v1183 = vand.u32 %v1156, 2147483648
    %v1184 = vor.u32 1.1754944e-38, %v1183
    %v1185 = vsel %vm1182, %v1184, %v1180
    %v1186 = vmul.f32 %v1140, %v1185
    %v1187 = vadd.f32 %v1171, 1.0
    %v1188 = vadd.f32 %v1186, 1.0
    %v1189 = vmul.f32 %v1105, %v1187
    %v1190 = vmul.f32 %v1106, %v1188
    %v1191 = vld [vmem:[%s14] sm:$0xff]
    %v1192 = vld [vmem:[%s14 + $0x8] sm:$0xff]
    %v1193 = vld [vmem:[%s14 + $0x10] sm:$0xff]
    %v1194 = vld [vmem:[%s14 + $0x18] sm:$0xff]
    %v1195 = vld [vmem:[%s14 + $0x20] sm:$0xff]
    %v1196 = vld [vmem:[%s14 + $0x28] sm:$0xff]
    %v1197 = vld [vmem:[%s14 + $0x30] sm:$0xff]
    %v1198 = vld [vmem:[%s14 + $0x38] sm:$0xff]
    %v1199 = vld [vmem:[%s15] sm:$0x1]
    %v1201 = vperm.slane %v1199, 0
    %vm1203 = vcmask 523264
    %v1205 = vsel %vm1203, %v1189, 0
    %v1208 = vsel %vm1203, %v1190, 0
    %1210 = vmatpush.msra.mxu0 0.0
    %1211 = vmatpush.msra.mxu0 0.0
    %1212 = vmatpush.msra.mxu0 0.0
    %1213 = vmatpush.msra.mxu0 0.0
    %1214 = vmatpush.msra.mxu0 0.0
    %1215 = vmatpush.msra.mxu0 0.0
    %1216 = vmatpush.msra.mxu0 0.0
    %1217 = vmatpush.msra.mxu0 0.0
    %1218 = vmatpush.msra.mxu0 %v1198
    %1219 = vmatpush.msra.mxu0 %v1197
    %1220 = vmatpush.msra.mxu0 %v1196
    %1221 = vmatpush.msra.mxu0 %v1195
    %1222 = vmatpush.msra.mxu0 %v1194
    %1223 = vmatpush.msra.mxu0 %v1193
    %1224 = vmatpush.msra.mxu0 %v1192
    %1225 = vmatpush.msra.mxu0 %v1191
    %1226 = vmatmul.f32.gmra.mxu0 %v1205
    %v1227 = vpop.f32.mrf.mxu0
    %v1228 = vadd.f32 %v1201, %v1227
    %1229 = vmatmul.f32.gmra.mxu0 %v1208
    %v1230 = vpop.f32.mrf.mxu0
    %v1231 = vadd.f32 %v1201, %v1230
    %1232 = vdwg.mxu0
    %v1233 = vadd.f32 %v1228, %v1066
    %v1234 = vadd.f32 %v1231, %v1067
    %v1235 = vld [vmem:[%s16] sm:$0x1]
    %v1236 = vld [vmem:[%s17] sm:$0x1]
    %v1237 = vsel %vm136, %v1233, 0.0
    %1238 = vadd.xlane.f32.xlu0 %v1237
    %v1239 = vpop.xlane.xlu0 %1238
    %v1240 = vsel %vm136, %v1234, 0.0
    %1241 = vadd.xlane.f32.xlu0 %v1240
    %v1242 = vpop.xlane.xlu0 %1241
    %v1243 = vmul.f32 %v1239, %v1019
    %v1244 = vmul.f32 %v1242, %v1019
    %v1245 = vsub.f32 %v1233, %v1243
    %v1246 = vsub.f32 %v1234, %v1244
    %v1247 = vmul.f32 %v1245, %v1245
    %v1248 = vmul.f32 %v1246, %v1246
    %v1249 = vsel %vm136, %v1247, 0.0
    %1250 = vadd.xlane.f32.xlu0 %v1249
    %v1251 = vpop.xlane.xlu0 %1250
    %v1252 = vsel %vm136, %v1248, 0.0
    %1253 = vadd.xlane.f32.xlu0 %v1252
    %v1254 = vpop.xlane.xlu0 %1253
    %v1255 = vmul.f32 %v1251, %v1019
    %v1256 = vmul.f32 %v1254, %v1019
    %v1257 = vadd.f32 %v1255, 1e-05
    %v1258 = vadd.f32 %v1256, 1e-05
    %v1259 = vrsqrt.pop %v1257
    %v1260 = vmul.f32 %v1259, %v1257
    %v1261 = vmul.f32 %v1260, %v1259
    %v1262 = vmul.f32 0.5, %v1261
    %v1263 = vsub.f32 1.5, %v1262
    %v1264 = vmul.f32 %v1259, %v1263
    %vm1265 = vweird.f32 %v1257
    %vm1266 = vweird.f32 %v1259
    %vm1267 = vmor %vm1265, %vm1266
    %v1268 = vsel %vm1267, %v1259, %v1264
    %v1269 = vrsqrt.pop %v1258
    %v1270 = vmul.f32 %v1269, %v1258
    %v1271 = vmul.f32 %v1270, %v1269
    %v1272 = vmul.f32 0.5, %v1271
    %v1273 = vsub.f32 1.5, %v1272
    %v1274 = vmul.f32 %v1269, %v1273
    %vm1275 = vweird.f32 %v1258
    %vm1276 = vweird.f32 %v1269
    %vm1277 = vmor %vm1275, %vm1276
    %v1278 = vsel %vm1277, %v1269, %v1274
    %v1279 = vmul.f32 %v1245, %v1268
    %v1280 = vmul.f32 %v1246, %v1278
    %v1282 = vperm.slane %v1235, 0
    %v1284 = vmul.f32 %v1279, %v1282
    %v1285 = vmul.f32 %v1280, %v1282
    %v1287 = vperm.slane %v1236, 0
    %v1289 = vadd.f32 %v1284, %v1287
    %v1290 = vadd.f32 %v1285, %v1287
    %1291 = vst.msk [vmem:[#allocation10] sm:$0xff] %vm136, %v1289
    %1292 = vst.msk [vmem:[#allocation10 + $0x8] sm:$0xff] %vm136, %v1290
    // Predicated region
    $region90: #{tpu_custom_call.1} parent=1 // pred_check
      _
    $region91: #{tpu_custom_call.1} parent=1 // pred_check_branch
      %1294 = sbr.rel (0) target = $region93
    $region92: #{tpu_custom_call.1} parent=1 // pred_region
      %1296 = vsyncadd [#allocation4], 0
      %s1297 = sshll.u32 [#allocation10], 4
      %s1298 = int_to_ptr.vmem [resolvable:$true] %s1297
      %s1299 = sshll.u32 %s18, 4
      %s1300 = int_to_ptr.hbm [resolvable:$true] %s1299
      %1305 = dma.vmem_to_hbm [thread:$0]  %s1298, 256, %s1300, [#allocation4], 128, 128, 8
    $region93: #{tpu_custom_call.1} parent=1 // pred_fallthru
      _
    // Predicated region
    $region94: #{tpu_custom_call.1} parent=1 // pred_check
      _
    $region95: #{tpu_custom_call.1} parent=1 // pred_check_branch
      %1307 = sbr.rel (0) target = $region97
    $region96: #{tpu_custom_call.1} parent=1 // pred_region
      %1309 = vsyncadd [#allocation12], 0
      %s1310 = sshll.u32 [#allocation11], 4
      %s1311 = int_to_ptr.vmem [resolvable:$true] %s1310
      %s1312 = sshll.u32 %s19, 4
      %s1313 = int_to_ptr.hbm [resolvable:$true] %s1312
      %1318 = dma.vmem_to_hbm [thread:$0]  %s1311, 1024, %s1313, [#allocation12], 128, 128, 8
    $region97: #{tpu_custom_call.1} parent=1 // pred_fallthru
      _
    // Predicated region
    $region98: #{tpu_custom_call.1} parent=1 // pred_check
      _
    $region99: #{tpu_custom_call.1} parent=1 // pred_check_branch
      %1320 = sbr.rel (0) target = $region101
    $region100: #{tpu_custom_call.1} parent=1 // pred_region
      %1322 = dma.done [#allocation4], 256
    $region101: #{tpu_custom_call.1} parent=1 // pred_fallthru
      _
    // Predicated region
    $region102: #{tpu_custom_call.1} parent=1 // pred_check
      _
    $region103: #{tpu_custom_call.1} parent=1 // pred_check_branch
      %1324 = sbr.rel (0) target = $region105
    $region104: #{tpu_custom_call.1} parent=1 // pred_region
      %1326 = dma.done [#allocation12], 1024
    $region105: #{tpu_custom_call.1} parent=1 // pred_fallthru
      _
    %1327 = vsyncpa [#allocation3], 1
    %1328 = vsyncpa [#allocation6], 1
    %1329 = vsyncpa [#allocation9], 1
    %1330 = vsyncpa [#allocation4], 1
    %1331 = vsyncpa [#allocation12], 1

</llo_original>
